<compile_context>
chip_gen: v6e
topology: v6e:2x2x1
jax: 0.10.0
libtpu: 0.0.40
codegen_flags: <defaults>
</compile_context>

<pallas_src>
import jax
import jax.numpy as jnp
import numpy as np
from jax import lax
from jax.experimental import pallas as pl
from jax.experimental.pallas import tpu as pltpu

# ------------------------- model hyper-parameters -------------------------
PATCH = 4        # image patch size
D = 32           # embedding dim
HID = 128        # MLP hidden dim (4 * D)
VOCAB = 100      # text vocab size
TEXT_LEN = 8     # text sequence length
B = 2            # batch
C, H, W = 4, 16, 16

NP = (H // PATCH) * (W // PATCH)     # image tokens per batch element (16)
S = NP + TEXT_LEN                    # multimodal sequence length (24)
N = B * S                            # folded rows (48)
PDIM = C * PATCH * PATCH             # patch vector length (64)


# =============================== kernel ====================================
def _layernorm(x, g, b, eps=1e-5):
    mu = jnp.mean(x, axis=-1, keepdims=True)
    var = jnp.mean((x - mu) ** 2, axis=-1, keepdims=True)
    return (x - mu) * lax.rsqrt(var + eps) * g + b


def turry_fused_kernel(
    patches_ref,        # (B*NP, PDIM)
    txt_emb_ref,        # (B*TEXT_LEN, D)
    attn_bias_ref,      # (N, N) additive bias (block-diag 0 / -1e30)
    pw_ref, pb_ref,     # patch embed weight / bias
    img_pos_ref,        # (NP, D)
    txt_pos_ref,        # (TEXT_LEN, D)
    ln1_g_ref, ln1_b_ref,
    wq_ref, bq_ref, wk_ref, bk_ref, wv_ref, bv_ref, wo_ref, bo_ref,
    ln2_g_ref, ln2_b_ref,
    w1_ref, b1_ref, w2_ref, b2_ref,
    o_ref,              # (N, D)
    x_sc,               # VMEM scratch (N, D)
):
    # ---- ImageTokenize: patch-embedding matmul (all batches folded) --------
    img = (
        jnp.dot(patches_ref[...], pw_ref[...], preferred_element_type=jnp.float32)
        + pb_ref[...]
    )  # (B*NP, D)

    # ---- assemble the multimodal sequence [img_b ; txt_b] per batch --------
    # (all sublane offsets/sizes are multiples of 8, so the stores are aligned)
    for b in range(B):
        x_sc[b * S: b * S + NP, :] = (
            img[b * NP: (b + 1) * NP, :] + img_pos_ref[...]
        )
        x_sc[b * S + NP: (b + 1) * S, :] = (
            txt_emb_ref[b * TEXT_LEN: (b + 1) * TEXT_LEN, :] + txt_pos_ref[...]
        )
    x = x_sc[...]  # (N, D)

    # ---- self attention (single head); per-batch isolation via attn bias ---
    h = _layernorm(x, ln1_g_ref[...], ln1_b_ref[...])
    scale = jnp.float32(1.0 / np.sqrt(D))
    q = (jnp.dot(h, wq_ref[...], preferred_element_type=jnp.float32)
         + bq_ref[...]) * scale
    k = jnp.dot(h, wk_ref[...], preferred_element_type=jnp.float32) + bk_ref[...]
    v = jnp.dot(h, wv_ref[...], preferred_element_type=jnp.float32) + bv_ref[...]

    # contraction over the last dim of both operands: no explicit k.T transpose
    scores = lax.dot_general(
        q, k,
        dimension_numbers=(((1,), (1,)), ((), ())),
        preferred_element_type=jnp.float32,
    ) + attn_bias_ref[...]                                        # (N, N)

    scores = scores - jnp.max(scores, axis=-1, keepdims=True)
    p = jnp.exp(scores)
    p = p * pl.reciprocal(jnp.sum(p, axis=-1, keepdims=True), approx=True)

    attn = jnp.dot(p, v, preferred_element_type=jnp.float32)      # (N, D)
    attn = (jnp.dot(attn, wo_ref[...], preferred_element_type=jnp.float32)
            + bo_ref[...])
    x = x + attn

    # ---- MLP ----------------------------------------------------------------
    h2 = _layernorm(x, ln2_g_ref[...], ln2_b_ref[...])
    m = jnp.dot(h2, w1_ref[...], preferred_element_type=jnp.float32) + b1_ref[...]
    m = jax.nn.gelu(m, approximate=True)
    m = jnp.dot(m, w2_ref[...], preferred_element_type=jnp.float32) + b2_ref[...]

    o_ref[...] = x + m


# ============================ pallas wrapper ===============================
def turry_fused(patches, txt_emb, attn_bias, params):
    weights = [
        params["patch_w"], params["patch_b"],
        params["img_pos"], params["txt_pos"],
        params["ln1_g"], params["ln1_b"],
        params["wq"], params["bq"], params["wk"], params["bk"],
        params["wv"], params["bv"], params["wo"], params["bo"],
        params["ln2_g"], params["ln2_b"],
        params["w1"], params["b1"], params["w2"], params["b2"],
    ]
    # No grid: the whole (folded) problem fits trivially in VMEM (<100 KB),
    # so a single kernel invocation avoids all per-step / per-launch overhead.
    return pl.pallas_call(
        turry_fused_kernel,
        out_shape=jax.ShapeDtypeStruct((N, D), jnp.float32),
        scratch_shapes=[pltpu.VMEM((N, D), jnp.float32)],
    )(patches, txt_emb, attn_bias, *weights)


# ============================== Turry model ================================
def init_params(key):
    ks = jax.random.split(key, 16)
    n = lambda k, shape: (jax.random.normal(k, shape, jnp.float32) * 0.02)
    return {
        # image tokenizer
        "patch_w": n(ks[0], (PDIM, D)),
        "patch_b": jnp.zeros((1, D), jnp.float32),
        "img_pos": n(ks[1], (NP, D)),
        # text tokenizer
        "tok_emb": n(ks[2], (VOCAB, D)),
        "txt_pos": n(ks[3], (TEXT_LEN, D)),
        # transformer block
        "ln1_g": jnp.ones((1, D), jnp.float32),
        "ln1_b": jnp.zeros((1, D), jnp.float32),
        "wq": n(ks[4], (D, D)), "bq": jnp.zeros((1, D), jnp.float32),
        "wk": n(ks[5], (D, D)), "bk": jnp.zeros((1, D), jnp.float32),
        "wv": n(ks[6], (D, D)), "bv": jnp.zeros((1, D), jnp.float32),
        "wo": n(ks[7], (D, D)), "bo": jnp.zeros((1, D), jnp.float32),
        "ln2_g": jnp.ones((1, D), jnp.float32),
        "ln2_b": jnp.zeros((1, D), jnp.float32),
        "w1": n(ks[8], (D, HID)), "b1": jnp.zeros((1, HID), jnp.float32),
        "w2": n(ks[9], (HID, D)), "b2": jnp.zeros((1, D), jnp.float32),
    }


def turry_forward(params, image, text):
    """image: (B, C, H, W) float32 NCHW; text: (B, TEXT_LEN) int32 token ids."""
    Bn = image.shape[0]

    # --- patchify (pure layout glue, fused by XLA under jit) ---
    ph, pw = H // PATCH, W // PATCH
    patches = image.reshape(Bn, C, ph, PATCH, pw, PATCH)
    patches = patches.transpose(0, 2, 4, 1, 3, 5)                # (B, ph, pw, C, p, p)
    patches = patches.reshape(Bn * ph * pw, PDIM)                # (B*NP, PDIM)

    # --- text embedding lookup (gather stays in XLA glue) ---
    txt_emb = jnp.take(params["tok_emb"], text.reshape(-1), axis=0)  # (B*T, D)

    # --- block-diagonal additive attention bias (keeps batches independent
    #     now that the batch is folded into one (B*S, D) matrix).
    # TODO(synk): `xxx` in the reference forward is an undefined variable
    # (presumably an attention mask); any real mask can be folded into this bias.
    bias = np.full((Bn * S, Bn * S), -1e30, np.float32)
    for b in range(Bn):
        bias[b * S:(b + 1) * S, b * S:(b + 1) * S] = 0.0
    attn_bias = jnp.asarray(bias)

    out = turry_fused(patches, txt_emb, attn_bias, params)       # (B*S, D)
    return out.reshape(Bn, S, D)


# ================================= main ====================================
if __name__ == "__main__":
    key = jax.random.PRNGKey(0)
    k_param, k_img, k_txt = jax.random.split(key, 3)

    params = init_params(k_param)
    image = jax.random.normal(k_img, (B, C, H, W), jnp.float32)
    text = jax.random.randint(k_txt, (B, TEXT_LEN), 0, VOCAB, dtype=jnp.int32)

    fwd = jax.jit(turry_forward)
    out = fwd(params, image, text)
    out = jax.block_until_ready(out)

    assert out.shape == (B, S, D), out.shape
    assert jnp.all(jnp.isfinite(out))
    print("KERNEL_OK")
</pallas_src>

<mosaic_0001>
module attributes {stable_mosaic.version = 11 : i64} {
  func.func @turry_fused_kernel(%arg0: memref<32x64xf32, #tpu.memory_space<vmem>>, %arg1: memref<16x32xf32, #tpu.memory_space<vmem>>, %arg2: memref<48x48xf32, #tpu.memory_space<vmem>>, %arg3: memref<64x32xf32, #tpu.memory_space<vmem>>, %arg4: memref<1x32xf32, #tpu.memory_space<vmem>>, %arg5: memref<16x32xf32, #tpu.memory_space<vmem>>, %arg6: memref<8x32xf32, #tpu.memory_space<vmem>>, %arg7: memref<1x32xf32, #tpu.memory_space<vmem>>, %arg8: memref<1x32xf32, #tpu.memory_space<vmem>>, %arg9: memref<32x32xf32, #tpu.memory_space<vmem>>, %arg10: memref<1x32xf32, #tpu.memory_space<vmem>>, %arg11: memref<32x32xf32, #tpu.memory_space<vmem>>, %arg12: memref<1x32xf32, #tpu.memory_space<vmem>>, %arg13: memref<32x32xf32, #tpu.memory_space<vmem>>, %arg14: memref<1x32xf32, #tpu.memory_space<vmem>>, %arg15: memref<32x32xf32, #tpu.memory_space<vmem>>, %arg16: memref<1x32xf32, #tpu.memory_space<vmem>>, %arg17: memref<1x32xf32, #tpu.memory_space<vmem>>, %arg18: memref<1x32xf32, #tpu.memory_space<vmem>>, %arg19: memref<32x128xf32, #tpu.memory_space<vmem>>, %arg20: memref<1x128xf32, #tpu.memory_space<vmem>>, %arg21: memref<128x32xf32, #tpu.memory_space<vmem>>, %arg22: memref<1x32xf32, #tpu.memory_space<vmem>>, %arg23: memref<48x32xf32, #tpu.memory_space<vmem>>, %arg24: memref<48x32xf32, #tpu.memory_space<vmem>>) attributes {dimension_semantics = [], scalar_prefetch = 0 : i64, scratch_operands = 1 : i64, tpu.core_type = #tpu.core_type<tc>} {
    %c0 = arith.constant 0 : index
    %c0_0 = arith.constant 0 : index
    %0 = vector.load %arg0[%c0, %c0_0] : memref<32x64xf32, #tpu.memory_space<vmem>>, vector<32x64xf32>
    %c0_1 = arith.constant 0 : index
    %c0_2 = arith.constant 0 : index
    %1 = vector.load %arg3[%c0_1, %c0_2] : memref<64x32xf32, #tpu.memory_space<vmem>>, vector<64x32xf32>
    %cst = arith.constant dense<0.000000e+00> : vector<32x32xf32>
    %2 = tpu.matmul %0, %1, %cst {dimension_numbers = #tpu.dot_dimension_numbers<[1], [0], [0], [1], [0, 0, 1, 1], [], []>} : vector<32x64xf32>, vector<64x32xf32>, vector<32x32xf32> -> vector<32x32xf32>
    %c0_3 = arith.constant 0 : index
    %c0_4 = arith.constant 0 : index
    %3 = vector.load %arg4[%c0_3, %c0_4] : memref<1x32xf32, #tpu.memory_space<vmem>>, vector<1x32xf32>
    %4 = vector.broadcast %3 : vector<1x32xf32> to vector<32x32xf32>
    %5 = arith.addf %2, %4 : vector<32x32xf32>
    %6 = vector.extract_strided_slice %5 {offsets = [0, 0], sizes = [16, 32], strides = [1, 1]} : vector<32x32xf32> to vector<16x32xf32>
    %c0_5 = arith.constant 0 : index
    %c0_6 = arith.constant 0 : index
    %7 = vector.load %arg5[%c0_5, %c0_6] : memref<16x32xf32, #tpu.memory_space<vmem>>, vector<16x32xf32>
    %8 = arith.addf %6, %7 : vector<16x32xf32>
    %c0_7 = arith.constant 0 : index
    %c0_8 = arith.constant 0 : index
    %9 = vector.load %arg24[%c0_7, %c0_8] : memref<48x32xf32, #tpu.memory_space<vmem>>, vector<16x32xf32>
    tpu.vector_store %arg24[%c0_7, %c0_8], %8 {strides = array<i32>} : memref<48x32xf32, #tpu.memory_space<vmem>>, vector<16x32xf32>,
    %c0_9 = arith.constant 0 : index
    %c0_10 = arith.constant 0 : index
    %10 = vector.load %arg1[%c0_9, %c0_10] : memref<16x32xf32, #tpu.memory_space<vmem>>, vector<8x32xf32>
    %c0_11 = arith.constant 0 : index
    %c0_12 = arith.constant 0 : index
    %11 = vector.load %arg6[%c0_11, %c0_12] : memref<8x32xf32, #tpu.memory_space<vmem>>, vector<8x32xf32>
    %12 = arith.addf %10, %11 : vector<8x32xf32>
    %c16 = arith.constant 16 : index
    %c0_13 = arith.constant 0 : index
    %13 = vector.load %arg24[%c16, %c0_13] : memref<48x32xf32, #tpu.memory_space<vmem>>, vector<8x32xf32>
    tpu.vector_store %arg24[%c16, %c0_13], %12 {strides = array<i32>} : memref<48x32xf32, #tpu.memory_space<vmem>>, vector<8x32xf32>,
    %14 = vector.extract_strided_slice %5 {offsets = [16, 0], sizes = [16, 32], strides = [1, 1]} : vector<32x32xf32> to vector<16x32xf32>
    %c0_14 = arith.constant 0 : index
    %c0_15 = arith.constant 0 : index
    %15 = vector.load %arg5[%c0_14, %c0_15] : memref<16x32xf32, #tpu.memory_space<vmem>>, vector<16x32xf32>
    %16 = arith.addf %14, %15 : vector<16x32xf32>
    %c24 = arith.constant 24 : index
    %c0_16 = arith.constant 0 : index
    %17 = vector.load %arg24[%c24, %c0_16] : memref<48x32xf32, #tpu.memory_space<vmem>>, vector<16x32xf32>
    tpu.vector_store %arg24[%c24, %c0_16], %16 {strides = array<i32>} : memref<48x32xf32, #tpu.memory_space<vmem>>, vector<16x32xf32>,
    %c8 = arith.constant 8 : index
    %c0_17 = arith.constant 0 : index
    %18 = vector.load %arg1[%c8, %c0_17] : memref<16x32xf32, #tpu.memory_space<vmem>>, vector<8x32xf32>
    %c0_18 = arith.constant 0 : index
    %c0_19 = arith.constant 0 : index
    %19 = vector.load %arg6[%c0_18, %c0_19] : memref<8x32xf32, #tpu.memory_space<vmem>>, vector<8x32xf32>
    %20 = arith.addf %18, %19 : vector<8x32xf32>
    %c40 = arith.constant 40 : index
    %c0_20 = arith.constant 0 : index
    %21 = vector.load %arg24[%c40, %c0_20] : memref<48x32xf32, #tpu.memory_space<vmem>>, vector<8x32xf32>
    tpu.vector_store %arg24[%c40, %c0_20], %20 {strides = array<i32>} : memref<48x32xf32, #tpu.memory_space<vmem>>, vector<8x32xf32>,
    %c0_21 = arith.constant 0 : index
    %c0_22 = arith.constant 0 : index
    %22 = vector.load %arg24[%c0_21, %c0_22] : memref<48x32xf32, #tpu.memory_space<vmem>>, vector<48x32xf32>
    %c0_23 = arith.constant 0 : index
    %c0_24 = arith.constant 0 : index
    %23 = vector.load %arg7[%c0_23, %c0_24] : memref<1x32xf32, #tpu.memory_space<vmem>>, vector<1x32xf32>
    %c0_25 = arith.constant 0 : index
    %c0_26 = arith.constant 0 : index
    %24 = vector.load %arg8[%c0_25, %c0_26] : memref<1x32xf32, #tpu.memory_space<vmem>>, vector<1x32xf32>
    %cst_27 = arith.constant dense<0.000000e+00> : vector<48xf32>
    %25 = vector.multi_reduction <add>, %22, %cst_27 [1] : vector<48x32xf32> to vector<48xf32>
    %26 = vector.shape_cast %25 : vector<48xf32> to vector<48x1xf32>
    %cst_28 = arith.constant 3.200000e+01 : f32
    %27 = vector.broadcast %cst_28 : f32 to vector<48x1xf32>
    %28 = arith.divf %26, %27 : vector<48x1xf32>
    %29 = vector.broadcast %28 : vector<48x1xf32> to vector<48x32xf32>
    %30 = arith.subf %22, %29 : vector<48x32xf32>
    %31 = arith.mulf %30, %30 : vector<48x32xf32>
    %cst_29 = arith.constant dense<0.000000e+00> : vector<48xf32>
    %32 = vector.multi_reduction <add>, %31, %cst_29 [1] : vector<48x32xf32> to vector<48xf32>
    %33 = vector.shape_cast %32 : vector<48xf32> to vector<48x1xf32>
    %cst_30 = arith.constant 3.200000e+01 : f32
    %34 = vector.broadcast %cst_30 : f32 to vector<48x1xf32>
    %35 = arith.divf %33, %34 : vector<48x1xf32>
    %36 = vector.broadcast %28 : vector<48x1xf32> to vector<48x32xf32>
    %37 = arith.subf %22, %36 : vector<48x32xf32>
    %cst_31 = arith.constant 9.99999974E-6 : f32
    %38 = vector.broadcast %cst_31 : f32 to vector<48x1xf32>
    %39 = arith.addf %35, %38 : vector<48x1xf32>
    %40 = math.rsqrt %39 : vector<48x1xf32>
    %41 = vector.broadcast %40 : vector<48x1xf32> to vector<48x32xf32>
    %42 = arith.mulf %37, %41 : vector<48x32xf32>
    %43 = vector.broadcast %23 : vector<1x32xf32> to vector<48x32xf32>
    %44 = arith.mulf %42, %43 : vector<48x32xf32>
    %45 = vector.broadcast %24 : vector<1x32xf32> to vector<48x32xf32>
    %46 = arith.addf %44, %45 : vector<48x32xf32>
    %c0_32 = arith.constant 0 : index
    %c0_33 = arith.constant 0 : index
    %47 = vector.load %arg9[%c0_32, %c0_33] : memref<32x32xf32, #tpu.memory_space<vmem>>, vector<32x32xf32>
    %cst_34 = arith.constant dense<0.000000e+00> : vector<48x32xf32>
    %48 = tpu.matmul %46, %47, %cst_34 {dimension_numbers = #tpu.dot_dimension_numbers<[1], [0], [0], [1], [0, 0, 1, 1], [], []>} : vector<48x32xf32>, vector<32x32xf32>, vector<48x32xf32> -> vector<48x32xf32>
    %c0_35 = arith.constant 0 : index
    %c0_36 = arith.constant 0 : index
    %49 = vector.load %arg10[%c0_35, %c0_36] : memref<1x32xf32, #tpu.memory_space<vmem>>, vector<1x32xf32>
    %50 = vector.broadcast %49 : vector<1x32xf32> to vector<48x32xf32>
    %51 = arith.addf %48, %50 : vector<48x32xf32>
    %cst_37 = arith.constant 0.176776692 : f32
    %52 = vector.broadcast %cst_37 : f32 to vector<48x32xf32>
    %53 = arith.mulf %51, %52 : vector<48x32xf32>
    %c0_38 = arith.constant 0 : index
    %c0_39 = arith.constant 0 : index
    %54 = vector.load %arg11[%c0_38, %c0_39] : memref<32x32xf32, #tpu.memory_space<vmem>>, vector<32x32xf32>
    %cst_40 = arith.constant dense<0.000000e+00> : vector<48x32xf32>
    %55 = tpu.matmul %46, %54, %cst_40 {dimension_numbers = #tpu.dot_dimension_numbers<[1], [0], [0], [1], [0, 0, 1, 1], [], []>} : vector<48x32xf32>, vector<32x32xf32>, vector<48x32xf32> -> vector<48x32xf32>
    %c0_41 = arith.constant 0 : index
    %c0_42 = arith.constant 0 : index
    %56 = vector.load %arg12[%c0_41, %c0_42] : memref<1x32xf32, #tpu.memory_space<vmem>>, vector<1x32xf32>
    %57 = vector.broadcast %56 : vector<1x32xf32> to vector<48x32xf32>
    %58 = arith.addf %55, %57 : vector<48x32xf32>
    %c0_43 = arith.constant 0 : index
    %c0_44 = arith.constant 0 : index
    %59 = vector.load %arg13[%c0_43, %c0_44] : memref<32x32xf32, #tpu.memory_space<vmem>>, vector<32x32xf32>
    %cst_45 = arith.constant dense<0.000000e+00> : vector<48x32xf32>
    %60 = tpu.matmul %46, %59, %cst_45 {dimension_numbers = #tpu.dot_dimension_numbers<[1], [0], [0], [1], [0, 0, 1, 1], [], []>} : vector<48x32xf32>, vector<32x32xf32>, vector<48x32xf32> -> vector<48x32xf32>
    %c0_46 = arith.constant 0 : index
    %c0_47 = arith.constant 0 : index
    %61 = vector.load %arg14[%c0_46, %c0_47] : memref<1x32xf32, #tpu.memory_space<vmem>>, vector<1x32xf32>
    %62 = vector.broadcast %61 : vector<1x32xf32> to vector<48x32xf32>
    %63 = arith.addf %60, %62 : vector<48x32xf32>
    %cst_48 = arith.constant dense<0.000000e+00> : vector<48x48xf32>
    %64 = tpu.matmul %53, %58, %cst_48 {dimension_numbers = #tpu.dot_dimension_numbers<[1], [1], [0], [0], [0, 0, 1, 0], [], []>} : vector<48x32xf32>, vector<48x32xf32>, vector<48x48xf32> -> vector<48x48xf32>
    %c0_49 = arith.constant 0 : index
    %c0_50 = arith.constant 0 : index
    %65 = vector.load %arg2[%c0_49, %c0_50] : memref<48x48xf32, #tpu.memory_space<vmem>>, vector<48x48xf32>
    %66 = arith.addf %64, %65 : vector<48x48xf32>
    %cst_51 = arith.constant dense<0xFF800000> : vector<48xf32>
    %67 = vector.multi_reduction <maximumf>, %66, %cst_51 [1] : vector<48x48xf32> to vector<48xf32>
    %68 = vector.shape_cast %67 : vector<48xf32> to vector<48x1xf32>
    %69 = vector.broadcast %68 : vector<48x1xf32> to vector<48x48xf32>
    %70 = arith.subf %66, %69 : vector<48x48xf32>
    %71 = math.exp %70 : vector<48x48xf32>
    %cst_52 = arith.constant dense<0.000000e+00> : vector<48xf32>
    %72 = vector.multi_reduction <add>, %71, %cst_52 [1] : vector<48x48xf32> to vector<48xf32>
    %73 = vector.shape_cast %72 : vector<48xf32> to vector<48x1xf32>
    %74 = tpu.reciprocal %73 {approx = true} : vector<48x1xf32> -> vector<48x1xf32>
    %75 = vector.broadcast %74 : vector<48x1xf32> to vector<48x48xf32>
    %76 = arith.mulf %71, %75 : vector<48x48xf32>
    %cst_53 = arith.constant dense<0.000000e+00> : vector<48x32xf32>
    %77 = tpu.matmul %76, %63, %cst_53 {dimension_numbers = #tpu.dot_dimension_numbers<[1], [0], [0], [1], [0, 0, 1, 1], [], []>} : vector<48x48xf32>, vector<48x32xf32>, vector<48x32xf32> -> vector<48x32xf32>
    %c0_54 = arith.constant 0 : index
    %c0_55 = arith.constant 0 : index
    %78 = vector.load %arg15[%c0_54, %c0_55] : memref<32x32xf32, #tpu.memory_space<vmem>>, vector<32x32xf32>
    %cst_56 = arith.constant dense<0.000000e+00> : vector<48x32xf32>
    %79 = tpu.matmul %77, %78, %cst_56 {dimension_numbers = #tpu.dot_dimension_numbers<[1], [0], [0], [1], [0, 0, 1, 1], [], []>} : vector<48x32xf32>, vector<32x32xf32>, vector<48x32xf32> -> vector<48x32xf32>
    %c0_57 = arith.constant 0 : index
    %c0_58 = arith.constant 0 : index
    %80 = vector.load %arg16[%c0_57, %c0_58] : memref<1x32xf32, #tpu.memory_space<vmem>>, vector<1x32xf32>
    %81 = vector.broadcast %80 : vector<1x32xf32> to vector<48x32xf32>
    %82 = arith.addf %79, %81 : vector<48x32xf32>
    %83 = arith.addf %22, %82 : vector<48x32xf32>
    %c0_59 = arith.constant 0 : index
    %c0_60 = arith.constant 0 : index
    %84 = vector.load %arg17[%c0_59, %c0_60] : memref<1x32xf32, #tpu.memory_space<vmem>>, vector<1x32xf32>
    %c0_61 = arith.constant 0 : index
    %c0_62 = arith.constant 0 : index
    %85 = vector.load %arg18[%c0_61, %c0_62] : memref<1x32xf32, #tpu.memory_space<vmem>>, vector<1x32xf32>
    %cst_63 = arith.constant dense<0.000000e+00> : vector<48xf32>
    %86 = vector.multi_reduction <add>, %83, %cst_63 [1] : vector<48x32xf32> to vector<48xf32>
    %87 = vector.shape_cast %86 : vector<48xf32> to vector<48x1xf32>
    %cst_64 = arith.constant 3.200000e+01 : f32
    %88 = vector.broadcast %cst_64 : f32 to vector<48x1xf32>
    %89 = arith.divf %87, %88 : vector<48x1xf32>
    %90 = vector.broadcast %89 : vector<48x1xf32> to vector<48x32xf32>
    %91 = arith.subf %83, %90 : vector<48x32xf32>
    %92 = arith.mulf %91, %91 : vector<48x32xf32>
    %cst_65 = arith.constant dense<0.000000e+00> : vector<48xf32>
    %93 = vector.multi_reduction <add>, %92, %cst_65 [1] : vector<48x32xf32> to vector<48xf32>
    %94 = vector.shape_cast %93 : vector<48xf32> to vector<48x1xf32>
    %cst_66 = arith.constant 3.200000e+01 : f32
    %95 = vector.broadcast %cst_66 : f32 to vector<48x1xf32>
    %96 = arith.divf %94, %95 : vector<48x1xf32>
    %97 = vector.broadcast %89 : vector<48x1xf32> to vector<48x32xf32>
    %98 = arith.subf %83, %97 : vector<48x32xf32>
    %cst_67 = arith.constant 9.99999974E-6 : f32
    %99 = vector.broadcast %cst_67 : f32 to vector<48x1xf32>
    %100 = arith.addf %96, %99 : vector<48x1xf32>
    %101 = math.rsqrt %100 : vector<48x1xf32>
    %102 = vector.broadcast %101 : vector<48x1xf32> to vector<48x32xf32>
    %103 = arith.mulf %98, %102 : vector<48x32xf32>
    %104 = vector.broadcast %84 : vector<1x32xf32> to vector<48x32xf32>
    %105 = arith.mulf %103, %104 : vector<48x32xf32>
    %106 = vector.broadcast %85 : vector<1x32xf32> to vector<48x32xf32>
    %107 = arith.addf %105, %106 : vector<48x32xf32>
    %c0_68 = arith.constant 0 : index
    %c0_69 = arith.constant 0 : index
    %108 = vector.load %arg19[%c0_68, %c0_69] : memref<32x128xf32, #tpu.memory_space<vmem>>, vector<32x128xf32>
    %cst_70 = arith.constant dense<0.000000e+00> : vector<48x128xf32>
    %109 = tpu.matmul %107, %108, %cst_70 {dimension_numbers = #tpu.dot_dimension_numbers<[1], [0], [0], [1], [0, 0, 1, 1], [], []>} : vector<48x32xf32>, vector<32x128xf32>, vector<48x128xf32> -> vector<48x128xf32>
    %c0_71 = arith.constant 0 : index
    %c0_72 = arith.constant 0 : index
    %110 = vector.load %arg20[%c0_71, %c0_72] : memref<1x128xf32, #tpu.memory_space<vmem>>, vector<1x128xf32>
    %111 = vector.broadcast %110 : vector<1x128xf32> to vector<48x128xf32>
    %112 = arith.addf %109, %111 : vector<48x128xf32>
    %113 = arith.mulf %112, %112 : vector<48x128xf32>
    %114 = arith.mulf %112, %113 : vector<48x128xf32>
    %cst_73 = arith.constant 4.471500e-02 : f32
    %115 = vector.broadcast %cst_73 : f32 to vector<48x128xf32>
    %116 = arith.mulf %115, %114 : vector<48x128xf32>
    %117 = arith.addf %112, %116 : vector<48x128xf32>
    %cst_74 = arith.constant 0.797884583 : f32
    %118 = vector.broadcast %cst_74 : f32 to vector<48x128xf32>
    %119 = arith.mulf %118, %117 : vector<48x128xf32>
    %120 = math.tanh %119 : vector<48x128xf32>
    %cst_75 = arith.constant 1.000000e+00 : f32
    %121 = vector.broadcast %cst_75 : f32 to vector<48x128xf32>
    %122 = arith.addf %121, %120 : vector<48x128xf32>
    %cst_76 = arith.constant 5.000000e-01 : f32
    %123 = vector.broadcast %cst_76 : f32 to vector<48x128xf32>
    %124 = arith.mulf %123, %122 : vector<48x128xf32>
    %125 = arith.mulf %112, %124 : vector<48x128xf32>
    %c0_77 = arith.constant 0 : index
    %c0_78 = arith.constant 0 : index
    %126 = vector.load %arg21[%c0_77, %c0_78] : memref<128x32xf32, #tpu.memory_space<vmem>>, vector<128x32xf32>
    %cst_79 = arith.constant dense<0.000000e+00> : vector<48x32xf32>
    %127 = tpu.matmul %125, %126, %cst_79 {dimension_numbers = #tpu.dot_dimension_numbers<[1], [0], [0], [1], [0, 0, 1, 1], [], []>} : vector<48x128xf32>, vector<128x32xf32>, vector<48x32xf32> -> vector<48x32xf32>
    %c0_80 = arith.constant 0 : index
    %c0_81 = arith.constant 0 : index
    %128 = vector.load %arg22[%c0_80, %c0_81] : memref<1x32xf32, #tpu.memory_space<vmem>>, vector<1x32xf32>
    %129 = vector.broadcast %128 : vector<1x32xf32> to vector<48x32xf32>
    %130 = arith.addf %127, %129 : vector<48x32xf32>
    %131 = arith.addf %83, %130 : vector<48x32xf32>
    %c0_82 = arith.constant 0 : index
    %c0_83 = arith.constant 0 : index
    %132 = vector.load %arg23[%c0_82, %c0_83] : memref<48x32xf32, #tpu.memory_space<vmem>>, vector<48x32xf32>
    tpu.vector_store %arg23[%c0_82, %c0_83], %131 {strides = array<i32>} : memref<48x32xf32, #tpu.memory_space<vmem>>, vector<48x32xf32>,
    return
  }
}

</mosaic_0001>

<llo_original>
// kernel: turry_forward.1
$region0: #{turry_forward.1}
  #allocation0 [shape = 'u32[]', space=smem, size = 0x4, offset = 0x4, fixed_abs, tag = 'smem constant byte address 0x4 - core index']
  #allocation1 [shape = 'u32[144,128]{1,0:T(1,128)}', space=vmem, size = 0x12000, scoped, tag = 'internal scratch']
  #allocation2 [shape = 'f32[48,32]{1,0:T(8,128)}', space=vmem, size = 0x6000, scoped, tag = 'scratch operand']
  %s0 = inlined_call_operand.vmem [shape: f32[32,64], index: 0, kind: input, shape index: {}]
  %s1 = inlined_call_operand.vmem [shape: f32[16,32], index: 1, kind: input, shape index: {}]
  %s2 = inlined_call_operand.vmem [shape: f32[48,48], index: 2, kind: input, shape index: {}]
  %s3 = inlined_call_operand.vmem [shape: f32[64,32], index: 3, kind: input, shape index: {}]
  %s4 = inlined_call_operand.vmem [shape: f32[1,32], index: 4, kind: input, shape index: {}]
  %s5 = inlined_call_operand.vmem [shape: f32[16,32], index: 5, kind: input, shape index: {}]
  %s6 = inlined_call_operand.vmem [shape: f32[8,32], index: 6, kind: input, shape index: {}]
  %s7 = inlined_call_operand.vmem [shape: f32[1,32], index: 7, kind: input, shape index: {}]
  %s8 = inlined_call_operand.vmem [shape: f32[1,32], index: 8, kind: input, shape index: {}]
  %s9 = inlined_call_operand.vmem [shape: f32[32,32], index: 9, kind: input, shape index: {}]
  %s10 = inlined_call_operand.vmem [shape: f32[1,32], index: 10, kind: input, shape index: {}]
  %s11 = inlined_call_operand.vmem [shape: f32[32,32], index: 11, kind: input, shape index: {}]
  %s12 = inlined_call_operand.vmem [shape: f32[1,32], index: 12, kind: input, shape index: {}]
  %s13 = inlined_call_operand.vmem [shape: f32[32,32], index: 13, kind: input, shape index: {}]
  %s14 = inlined_call_operand.vmem [shape: f32[1,32], index: 14, kind: input, shape index: {}]
  %s15 = inlined_call_operand.vmem [shape: f32[32,32], index: 15, kind: input, shape index: {}]
  %s16 = inlined_call_operand.vmem [shape: f32[1,32], index: 16, kind: input, shape index: {}]
  %s17 = inlined_call_operand.vmem [shape: f32[1,32], index: 17, kind: input, shape index: {}]
  %s18 = inlined_call_operand.vmem [shape: f32[1,32], index: 18, kind: input, shape index: {}]
  %s19 = inlined_call_operand.vmem [shape: f32[32,128], index: 19, kind: input, shape index: {}]
  %s20 = inlined_call_operand.vmem [shape: f32[1,128], index: 20, kind: input, shape index: {}]
  %s21 = inlined_call_operand.vmem [shape: f32[128,32], index: 21, kind: input, shape index: {}]
  %s22 = inlined_call_operand.vmem [shape: f32[1,32], index: 22, kind: input, shape index: {}]
  %s23 = inlined_call_operand.hbm [shape: f32[48,32], index: 23, kind: output, shape index: {}]
  %s24 = sld [smem:[#allocation0]]
  $region102: #{turry_forward.1} parent=0
    _
  %s26 = ssub.s32 1, %s24
  %s27 = scalar_select 0, %s26, %s24
  $region1: #{turry_forward.1} parent=0
    #allocation3 [shape = 'u8[24576]{0}', space=vmem, size = 0x6000, scoped, tag = 'output window, operand 0, single buffered']
    #allocation4 [shape = 's32[1]{0}', space=sflag, size = 0x4, scoped, tag = 'scoped memory for turry_forward.1']
    %28 = vsyncpa [#allocation4], 0
    // Predicated region
    $region2: #{turry_forward.1} parent=1 // pred_check
      _
    $region3: #{turry_forward.1} parent=1 // pred_check_branch
      %30 = sbr.rel (0) target = $region5
    $region4: #{turry_forward.1} parent=1 // pred_region
      _
    $region5: #{turry_forward.1} parent=1 // pred_fallthru
      _
    // Predicated region
    $region6: #{turry_forward.1} parent=1 // pred_check
      _
    $region7: #{turry_forward.1} parent=1 // pred_check_branch
      %32 = sbr.rel (0) target = $region9
    $region8: #{turry_forward.1} parent=1 // pred_region
      _
    $region9: #{turry_forward.1} parent=1 // pred_fallthru
      _
    // Predicated region
    $region10: #{turry_forward.1} parent=1 // pred_check
      _
    $region11: #{turry_forward.1} parent=1 // pred_check_branch
      %34 = sbr.rel (0) target = $region13
    $region12: #{turry_forward.1} parent=1 // pred_region
      _
    $region13: #{turry_forward.1} parent=1 // pred_fallthru
      _
    // Predicated region
    $region14: #{turry_forward.1} parent=1 // pred_check
      _
    $region15: #{turry_forward.1} parent=1 // pred_check_branch
      %36 = sbr.rel (0) target = $region17
    $region16: #{turry_forward.1} parent=1 // pred_region
      _
    $region17: #{turry_forward.1} parent=1 // pred_fallthru
      _
    // Predicated region
    $region18: #{turry_forward.1} parent=1 // pred_check
      _
    $region19: #{turry_forward.1} parent=1 // pred_check_branch
      %38 = sbr.rel (0) target = $region21
    $region20: #{turry_forward.1} parent=1 // pred_region
      _
    $region21: #{turry_forward.1} parent=1 // pred_fallthru
      _
    // Predicated region
    $region22: #{turry_forward.1} parent=1 // pred_check
      _
    $region23: #{turry_forward.1} parent=1 // pred_check_branch
      %40 = sbr.rel (0) target = $region25
    $region24: #{turry_forward.1} parent=1 // pred_region
      _
    $region25: #{turry_forward.1} parent=1 // pred_fallthru
      _
    // Predicated region
    $region26: #{turry_forward.1} parent=1 // pred_check
      _
    $region27: #{turry_forward.1} parent=1 // pred_check_branch
      %42 = sbr.rel (0) target = $region29
    $region28: #{turry_forward.1} parent=1 // pred_region
      _
    $region29: #{turry_forward.1} parent=1 // pred_fallthru
      _
    // Predicated region
    $region30: #{turry_forward.1} parent=1 // pred_check
      _
    $region31: #{turry_forward.1} parent=1 // pred_check_branch
      %44 = sbr.rel (0) target = $region33
    $region32: #{turry_forward.1} parent=1 // pred_region
      _
    $region33: #{turry_forward.1} parent=1 // pred_fallthru
      _
    // Predicated region
    $region34: #{turry_forward.1} parent=1 // pred_check
      _
    $region35: #{turry_forward.1} parent=1 // pred_check_branch
      %46 = sbr.rel (0) target = $region37
    $region36: #{turry_forward.1} parent=1 // pred_region
      _
    $region37: #{turry_forward.1} parent=1 // pred_fallthru
      _
    // Predicated region
    $region38: #{turry_forward.1} parent=1 // pred_check
      _
    $region39: #{turry_forward.1} parent=1 // pred_check_branch
      %48 = sbr.rel (0) target = $region41
    $region40: #{turry_forward.1} parent=1 // pred_region
      _
    $region41: #{turry_forward.1} parent=1 // pred_fallthru
      _
    // Predicated region
    $region42: #{turry_forward.1} parent=1 // pred_check
      _
    $region43: #{turry_forward.1} parent=1 // pred_check_branch
      %50 = sbr.rel (0) target = $region45
    $region44: #{turry_forward.1} parent=1 // pred_region
      _
    $region45: #{turry_forward.1} parent=1 // pred_fallthru
      _
    // Predicated region
    $region46: #{turry_forward.1} parent=1 // pred_check
      _
    $region47: #{turry_forward.1} parent=1 // pred_check_branch
      %52 = sbr.rel (0) target = $region49
    $region48: #{turry_forward.1} parent=1 // pred_region
      _
    $region49: #{turry_forward.1} parent=1 // pred_fallthru
      _
    // Predicated region
    $region50: #{turry_forward.1} parent=1 // pred_check
      _
    $region51: #{turry_forward.1} parent=1 // pred_check_branch
      %54 = sbr.rel (0) target = $region53
    $region52: #{turry_forward.1} parent=1 // pred_region
      _
    $region53: #{turry_forward.1} parent=1 // pred_fallthru
      _
    // Predicated region
    $region54: #{turry_forward.1} parent=1 // pred_check
      _
    $region55: #{turry_forward.1} parent=1 // pred_check_branch
      %56 = sbr.rel (0) target = $region57
    $region56: #{turry_forward.1} parent=1 // pred_region
      _
    $region57: #{turry_forward.1} parent=1 // pred_fallthru
      _
    // Predicated region
    $region58: #{turry_forward.1} parent=1 // pred_check
      _
    $region59: #{turry_forward.1} parent=1 // pred_check_branch
      %58 = sbr.rel (0) target = $region61
    $region60: #{turry_forward.1} parent=1 // pred_region
      _
    $region61: #{turry_forward.1} parent=1 // pred_fallthru
      _
    // Predicated region
    $region62: #{turry_forward.1} parent=1 // pred_check
      _
    $region63: #{turry_forward.1} parent=1 // pred_check_branch
      %60 = sbr.rel (0) target = $region65
    $region64: #{turry_forward.1} parent=1 // pred_region
      _
    $region65: #{turry_forward.1} parent=1 // pred_fallthru
      _
    // Predicated region
    $region66: #{turry_forward.1} parent=1 // pred_check
      _
    $region67: #{turry_forward.1} parent=1 // pred_check_branch
      %62 = sbr.rel (0) target = $region69
    $region68: #{turry_forward.1} parent=1 // pred_region
      _
    $region69: #{turry_forward.1} parent=1 // pred_fallthru
      _
    // Predicated region
    $region70: #{turry_forward.1} parent=1 // pred_check
      _
    $region71: #{turry_forward.1} parent=1 // pred_check_branch
      %64 = sbr.rel (0) target = $region73
    $region72: #{turry_forward.1} parent=1 // pred_region
      _
    $region73: #{turry_forward.1} parent=1 // pred_fallthru
      _
    // Predicated region
    $region74: #{turry_forward.1} parent=1 // pred_check
      _
    $region75: #{turry_forward.1} parent=1 // pred_check_branch
      %66 = sbr.rel (0) target = $region77
    $region76: #{turry_forward.1} parent=1 // pred_region
      _
    $region77: #{turry_forward.1} parent=1 // pred_fallthru
      _
    // Predicated region
    $region78: #{turry_forward.1} parent=1 // pred_check
      _
    $region79: #{turry_forward.1} parent=1 // pred_check_branch
      %68 = sbr.rel (0) target = $region81
    $region80: #{turry_forward.1} parent=1 // pred_region
      _
    $region81: #{turry_forward.1} parent=1 // pred_fallthru
      _
    // Predicated region
    $region82: #{turry_forward.1} parent=1 // pred_check
      _
    $region83: #{turry_forward.1} parent=1 // pred_check_branch
      %70 = sbr.rel (0) target = $region85
    $region84: #{turry_forward.1} parent=1 // pred_region
      _
    $region85: #{turry_forward.1} parent=1 // pred_fallthru
      _
    // Predicated region
    $region86: #{turry_forward.1} parent=1 // pred_check
      _
    $region87: #{turry_forward.1} parent=1 // pred_check_branch
      %72 = sbr.rel (0) target = $region89
    $region88: #{turry_forward.1} parent=1 // pred_region
      _
    $region89: #{turry_forward.1} parent=1 // pred_fallthru
      _
    // Predicated region
    $region90: #{turry_forward.1} parent=1 // pred_check
      _
    $region91: #{turry_forward.1} parent=1 // pred_check_branch
      %74 = sbr.rel (0) target = $region93
    $region92: #{turry_forward.1} parent=1 // pred_region
      _
    $region93: #{turry_forward.1} parent=1 // pred_fallthru
      _
    %v75 = vld [vmem:[%s0] sm:$0xff]
    %v76 = vld [vmem:[%s0 + $0x8] sm:$0xff]
    %v77 = vld [vmem:[%s0 + $0x10] sm:$0xff]
    %v78 = vld [vmem:[%s0 + $0x18] sm:$0xff]
    %v79 = vld [vmem:[%s3] sm:$0xff]
    %v80 = vld [vmem:[%s3 + $0x8] sm:$0xff]
    %v81 = vld [vmem:[%s3 + $0x10] sm:$0xff]
    %v82 = vld [vmem:[%s3 + $0x18] sm:$0xff]
    %v83 = vld [vmem:[%s3 + $0x20] sm:$0xff]
    %v84 = vld [vmem:[%s3 + $0x28] sm:$0xff]
    %v85 = vld [vmem:[%s3 + $0x30] sm:$0xff]
    %v86 = vld [vmem:[%s3 + $0x38] sm:$0xff]
    %v87 = vld [vmem:[%s4] sm:$0x1]
    %v89 = vlaneseq
    %v90 = vshrl.u32 %v89, 7
    %v91 = vsub.s32 0, %v90
    %v92 = vrot.slane %v87, %v91
    %vm94 = vcmask 523264
    %v96 = vsel %vm94, %v75, 0
    %v99 = vsel %vm94, %v76, 0
    %v102 = vsel %vm94, %v77, 0
    %v105 = vsel %vm94, %v78, 0
    %107 = vmatprep.subr.mxu0 0.0
    %108 = vmatpush1.msra.mxu0 0.0
    %109 = vmatprep.subr.mxu0 0.0
    %110 = vmatpush1.msra.mxu0 0.0
    %111 = vmatprep.subr.mxu0 0.0
    %112 = vmatpush1.msra.mxu0 0.0
    %113 = vmatprep.subr.mxu0 0.0
    %114 = vmatpush1.msra.mxu0 0.0
    %115 = vmatprep.subr.mxu0 0.0
    %116 = vmatpush1.msra.mxu0 0.0
    %117 = vmatprep.subr.mxu0 0.0
    %118 = vmatpush1.msra.mxu0 0.0
    %119 = vmatprep.subr.mxu0 0.0
    %120 = vmatpush1.msra.mxu0 0.0
    %121 = vmatprep.subr.mxu0 0.0
    %122 = vmatpush1.msra.mxu0 0.0
    %123 = vmatprep.subr.mxu0 0.0
    %124 = vmatpush1.msra.mxu0 %v86
    %125 = vmatprep.subr.mxu0 0.0
    %126 = vmatpush1.msra.mxu0 %v85
    %127 = vmatprep.subr.mxu0 0.0
    %128 = vmatpush1.msra.mxu0 %v84
    %129 = vmatprep.subr.mxu0 0.0
    %130 = vmatpush1.msra.mxu0 %v83
    %131 = vmatprep.subr.mxu0 0.0
    %132 = vmatpush1.msra.mxu0 %v82
    %133 = vmatprep.subr.mxu0 0.0
    %134 = vmatpush1.msra.mxu0 %v81
    %135 = vmatprep.subr.mxu0 0.0
    %136 = vmatpush1.msra.mxu0 %v80
    %137 = vmatprep.subr.mxu0 0.0
    %138 = vmatpush1.msra.mxu0 %v79
    %139 = vmatprep.subr.mxu0 0.0
    %140 = vmatpush2.msra.mxu0 0.0
    %141 = vmatprep.subr.mxu0 0.0
    %142 = vmatpush2.msra.mxu0 0.0
    %143 = vmatprep.subr.mxu0 0.0
    %144 = vmatpush2.msra.mxu0 0.0
    %145 = vmatprep.subr.mxu0 0.0
    %146 = vmatpush2.msra.mxu0 0.0
    %147 = vmatprep.subr.mxu0 0.0
    %148 = vmatpush2.msra.mxu0 0.0
    %149 = vmatprep.subr.mxu0 0.0
    %150 = vmatpush2.msra.mxu0 0.0
    %151 = vmatprep.subr.mxu0 0.0
    %152 = vmatpush2.msra.mxu0 0.0
    %153 = vmatprep.subr.mxu0 0.0
    %154 = vmatpush2.msra.mxu0 0.0
    %155 = vmatprep.subr.mxu0 0.0
    %156 = vmatpush2.msra.mxu0 0.0
    %157 = vmatprep.subr.mxu0 0.0
    %158 = vmatpush2.msra.mxu0 0.0
    %159 = vmatprep.subr.mxu0 0.0
    %160 = vmatpush2.msra.mxu0 0.0
    %161 = vmatprep.subr.mxu0 0.0
    %162 = vmatpush2.msra.mxu0 0.0
    %163 = vmatprep.subr.mxu0 0.0
    %164 = vmatpush2.msra.mxu0 0.0
    %165 = vmatprep.subr.mxu0 0.0
    %166 = vmatpush2.msra.mxu0 0.0
    %167 = vmatprep.subr.mxu0 0.0
    %168 = vmatpush2.msra.mxu0 0.0
    %169 = vmatprep.subr.mxu0 0.0
    %170 = vmatpush2.msra.mxu0 0.0
    %171 = vmatprep.mubr.f32.mxu0 0.0
    %172 = vmatmul.mubr.f32.gmra.mxu0 %v96
    %v173 = vpop.f32.mrf.mxu0
    %v174 = vadd.f32 %v92, %v173
    %v175 = vpop.f32.mrf.mxu0
    %176 = vmatprep.mubr.f32.mxu0 0.0
    %177 = vmatmul.mubr.f32.gmra.mxu0 %v99
    %v178 = vpop.f32.mrf.mxu0
    %v179 = vadd.f32 %v92, %v178
    %v180 = vpop.f32.mrf.mxu0
    %181 = vmatprep.mubr.f32.mxu0 0.0
    %182 = vmatmul.mubr.f32.gmra.mxu0 %v102
    %v183 = vpop.f32.mrf.mxu0
    %v184 = vadd.f32 %v92, %v183
    %v185 = vpop.f32.mrf.mxu0
    %186 = vmatprep.mubr.f32.mxu0 0.0
    %187 = vmatmul.mubr.f32.gmra.mxu0 %v105
    %v188 = vpop.f32.mrf.mxu0
    %v189 = vadd.f32 %v92, %v188
    %v190 = vpop.f32.mrf.mxu0
    %191 = vdwg.mxu0
    %v192 = vld [vmem:[%s5] sm:$0xff]
    %v193 = vld [vmem:[%s5 + $0x8] sm:$0xff]
    %v194 = vadd.f32 %v174, %v192
    %v195 = vadd.f32 %v179, %v193
    %vm196 = vcmask 261120
    %197 = vst.msk [vmem:[#allocation2] sm:$0xff] %vm196, %v194
    %198 = vst.msk [vmem:[#allocation2 + $0x8] sm:$0xff] %vm196, %v195
    %v199 = vld [vmem:[%s1] sm:$0xff]
    %v200 = vld [vmem:[%s6] sm:$0xff]
    %v201 = vadd.f32 %v199, %v200
    %202 = vst.msk [vmem:[#allocation2 + $0x10] sm:$0xff] %vm196, %v201
    %v203 = vld [vmem:[%s5] sm:$0xff]
    %v204 = vld [vmem:[%s5 + $0x8] sm:$0xff]
    %v205 = vadd.f32 %v184, %v203
    %v206 = vadd.f32 %v189, %v204
    %207 = vst.msk [vmem:[#allocation2 + $0x18] sm:$0xff] %vm196, %v205
    %208 = vst.msk [vmem:[#allocation2 + $0x20] sm:$0xff] %vm196, %v206
    %v209 = vld [vmem:[%s1 + $0x8] sm:$0xff]
    %v210 = vld [vmem:[%s6] sm:$0xff]
    %v211 = vadd.f32 %v209, %v210
    %212 = vst.msk [vmem:[#allocation2 + $0x28] sm:$0xff] %vm196, %v211
    %v213 = vld [vmem:[#allocation2] sm:$0xff]
    %v214 = vld [vmem:[#allocation2 + $0x8] sm:$0xff]
    %v215 = vld [vmem:[#allocation2 + $0x10] sm:$0xff]
    %v216 = vld [vmem:[#allocation2 + $0x18] sm:$0xff]
    %v217 = vld [vmem:[#allocation2 + $0x20] sm:$0xff]
    %v218 = vld [vmem:[#allocation2 + $0x28] sm:$0xff]
    %v219 = vld [vmem:[%s7] sm:$0x1]
    %v220 = vld [vmem:[%s8] sm:$0x1]
    %v221 = vsel %vm196, %v213, 0.0
    %222 = vadd.xlane.f32.xlu0 %v221
    %v223 = vpop.xlane.xlu0 %222
    %v224 = vsel %vm196, %v214, 0.0
    %225 = vadd.xlane.f32.xlu0 %v224
    %v226 = vpop.xlane.xlu0 %225
    %v227 = vsel %vm196, %v215, 0.0
    %228 = vadd.xlane.f32.xlu0 %v227
    %v229 = vpop.xlane.xlu0 %228
    %v230 = vsel %vm196, %v216, 0.0
    %231 = vadd.xlane.f32.xlu0 %v230
    %v232 = vpop.xlane.xlu0 %231
    %v233 = vsel %vm196, %v217, 0.0
    %234 = vadd.xlane.f32.xlu0 %v233
    %v235 = vpop.xlane.xlu0 %234
    %v236 = vsel %vm196, %v218, 0.0
    %237 = vadd.xlane.f32.xlu0 %v236
    %v238 = vpop.xlane.xlu0 %237
    %v239 = vrcp.pop 32.0
    %v240 = vmul.f32 %v223, %v239
    %v241 = vmul.f32 %v226, %v239
    %v242 = vmul.f32 %v229, %v239
    %v243 = vmul.f32 %v232, %v239
    %v244 = vmul.f32 %v235, %v239
    %v245 = vmul.f32 %v238, %v239
    %v246 = vsub.f32 %v213, %v240
    %v247 = vsub.f32 %v214, %v241
    %v248 = vsub.f32 %v215, %v242
    %v249 = vsub.f32 %v216, %v243
    %v250 = vsub.f32 %v217, %v244
    %v251 = vsub.f32 %v218, %v245
    %v252 = vmul.f32 %v246, %v246
    %v253 = vmul.f32 %v247, %v247
    %v254 = vmul.f32 %v248, %v248
    %v255 = vmul.f32 %v249, %v249
    %v256 = vmul.f32 %v250, %v250
    %v257 = vmul.f32 %v251, %v251
    %v258 = vsel %vm196, %v252, 0.0
    %259 = vadd.xlane.f32.xlu0 %v258
    %v260 = vpop.xlane.xlu0 %259
    %v261 = vsel %vm196, %v253, 0.0
    %262 = vadd.xlane.f32.xlu0 %v261
    %v263 = vpop.xlane.xlu0 %262
    %v264 = vsel %vm196, %v254, 0.0
    %265 = vadd.xlane.f32.xlu0 %v264
    %v266 = vpop.xlane.xlu0 %265
    %v267 = vsel %vm196, %v255, 0.0
    %268 = vadd.xlane.f32.xlu0 %v267
    %v269 = vpop.xlane.xlu0 %268
    %v270 = vsel %vm196, %v256, 0.0
    %271 = vadd.xlane.f32.xlu0 %v270
    %v272 = vpop.xlane.xlu0 %271
    %v273 = vsel %vm196, %v257, 0.0
    %274 = vadd.xlane.f32.xlu0 %v273
    %v275 = vpop.xlane.xlu0 %274
    %v276 = vmul.f32 %v260, %v239
    %v277 = vmul.f32 %v263, %v239
    %v278 = vmul.f32 %v266, %v239
    %v279 = vmul.f32 %v269, %v239
    %v280 = vmul.f32 %v272, %v239
    %v281 = vmul.f32 %v275, %v239
    %v282 = vadd.f32 %v276, 1e-05
    %v283 = vadd.f32 %v277, 1e-05
    %v284 = vadd.f32 %v278, 1e-05
    %v285 = vadd.f32 %v279, 1e-05
    %v286 = vadd.f32 %v280, 1e-05
    %v287 = vadd.f32 %v281, 1e-05
    %v288 = vrsqrt.pop %v282
    %v289 = vrsqrt.pop %v283
    %v290 = vrsqrt.pop %v284
    %v291 = vrsqrt.pop %v285
    %v292 = vrsqrt.pop %v286
    %v293 = vrsqrt.pop %v287
    %v294 = vmul.f32 %v246, %v288
    %v295 = vmul.f32 %v247, %v289
    %v296 = vmul.f32 %v248, %v290
    %v297 = vmul.f32 %v249, %v291
    %v298 = vmul.f32 %v250, %v292
    %v299 = vmul.f32 %v251, %v293
    %v301 = vlaneseq
    %v302 = vshrl.u32 %v301, 7
    %v303 = vsub.s32 0, %v302
    %v304 = vrot.slane %v219, %v303
    %v306 = vmul.f32 %v294, %v304
    %v307 = vmul.f32 %v295, %v304
    %v308 = vmul.f32 %v296, %v304
    %v309 = vmul.f32 %v297, %v304
    %v310 = vmul.f32 %v298, %v304
    %v311 = vmul.f32 %v299, %v304
    %v313 = vlaneseq
    %v314 = vshrl.u32 %v313, 7
    %v315 = vsub.s32 0, %v314
    %v316 = vrot.slane %v220, %v315
    %v318 = vadd.f32 %v306, %v316
    %v319 = vadd.f32 %v307, %v316
    %v320 = vadd.f32 %v308, %v316
    %v321 = vadd.f32 %v309, %v316
    %v322 = vadd.f32 %v310, %v316
    %v323 = vadd.f32 %v311, %v316
    %v324 = vld [vmem:[%s9] sm:$0xff]
    %v325 = vld [vmem:[%s9 + $0x8] sm:$0xff]
    %v326 = vld [vmem:[%s9 + $0x10] sm:$0xff]
    %v327 = vld [vmem:[%s9 + $0x18] sm:$0xff]
    %v328 = vld [vmem:[%s10] sm:$0x1]
    %v330 = vlaneseq
    %v331 = vshrl.u32 %v330, 7
    %v332 = vsub.s32 0, %v331
    %v333 = vrot.slane %v328, %v332
    %v336 = vsel %vm196, %v318, 0
    %v339 = vsel %vm196, %v319, 0
    %v342 = vsel %vm196, %v320, 0
    %v345 = vsel %vm196, %v321, 0
    %v348 = vsel %vm196, %v322, 0
    %v351 = vsel %vm196, %v323, 0
    %353 = vmatprep.subr.mxu0 0.0
    %354 = vmatpush1.msra.mxu0 0.0
    %355 = vmatprep.subr.mxu0 0.0
    %356 = vmatpush1.msra.mxu0 0.0
    %357 = vmatprep.subr.mxu0 0.0
    %358 = vmatpush1.msra.mxu0 0.0
    %359 = vmatprep.subr.mxu0 0.0
    %360 = vmatpush1.msra.mxu0 0.0
    %361 = vmatprep.subr.mxu0 0.0
    %362 = vmatpush1.msra.mxu0 0.0
    %363 = vmatprep.subr.mxu0 0.0
    %364 = vmatpush1.msra.mxu0 0.0
    %365 = vmatprep.subr.mxu0 0.0
    %366 = vmatpush1.msra.mxu0 0.0
    %367 = vmatprep.subr.mxu0 0.0
    %368 = vmatpush1.msra.mxu0 0.0
    %369 = vmatprep.subr.mxu0 0.0
    %370 = vmatpush1.msra.mxu0 0.0
    %371 = vmatprep.subr.mxu0 0.0
    %372 = vmatpush1.msra.mxu0 0.0
    %373 = vmatprep.subr.mxu0 0.0
    %374 = vmatpush1.msra.mxu0 0.0
    %375 = vmatprep.subr.mxu0 0.0
    %376 = vmatpush1.msra.mxu0 0.0
    %377 = vmatprep.subr.mxu0 0.0
    %378 = vmatpush1.msra.mxu0 %v327
    %379 = vmatprep.subr.mxu0 0.0
    %380 = vmatpush1.msra.mxu0 %v326
    %381 = vmatprep.subr.mxu0 0.0
    %382 = vmatpush1.msra.mxu0 %v325
    %383 = vmatprep.subr.mxu0 0.0
    %384 = vmatpush1.msra.mxu0 %v324
    %385 = vmatprep.subr.mxu0 0.0
    %386 = vmatpush2.msra.mxu0 0.0
    %387 = vmatprep.subr.mxu0 0.0
    %388 = vmatpush2.msra.mxu0 0.0
    %389 = vmatprep.subr.mxu0 0.0
    %390 = vmatpush2.msra.mxu0 0.0
    %391 = vmatprep.subr.mxu0 0.0
    %392 = vmatpush2.msra.mxu0 0.0
    %393 = vmatprep.subr.mxu0 0.0
    %394 = vmatpush2.msra.mxu0 0.0
    %395 = vmatprep.subr.mxu0 0.0
    %396 = vmatpush2.msra.mxu0 0.0
    %397 = vmatprep.subr.mxu0 0.0
    %398 = vmatpush2.msra.mxu0 0.0
    %399 = vmatprep.subr.mxu0 0.0
    %400 = vmatpush2.msra.mxu0 0.0
    %401 = vmatprep.subr.mxu0 0.0
    %402 = vmatpush2.msra.mxu0 0.0
    %403 = vmatprep.subr.mxu0 0.0
    %404 = vmatpush2.msra.mxu0 0.0
    %405 = vmatprep.subr.mxu0 0.0
    %406 = vmatpush2.msra.mxu0 0.0
    %407 = vmatprep.subr.mxu0 0.0
    %408 = vmatpush2.msra.mxu0 0.0
    %409 = vmatprep.subr.mxu0 0.0
    %410 = vmatpush2.msra.mxu0 0.0
    %411 = vmatprep.subr.mxu0 0.0
    %412 = vmatpush2.msra.mxu0 0.0
    %413 = vmatprep.subr.mxu0 0.0
    %414 = vmatpush2.msra.mxu0 0.0
    %415 = vmatprep.subr.mxu0 0.0
    %416 = vmatpush2.msra.mxu0 0.0
    %417 = vmatprep.mubr.f32.mxu0 0.0
    %418 = vmatmul.mubr.f32.gmra.mxu0 %v336
    %v419 = vpop.f32.mrf.mxu0
    %v420 = vadd.f32 %v333, %v419
    %v421 = vpop.f32.mrf.mxu0
    %422 = vmatprep.mubr.f32.mxu0 0.0
    %423 = vmatmul.mubr.f32.gmra.mxu0 %v339
    %v424 = vpop.f32.mrf.mxu0
    %v425 = vadd.f32 %v333, %v424
    %v426 = vpop.f32.mrf.mxu0
    %427 = vmatprep.mubr.f32.mxu0 0.0
    %428 = vmatmul.mubr.f32.gmra.mxu0 %v342
    %v429 = vpop.f32.mrf.mxu0
    %v430 = vadd.f32 %v333, %v429
    %v431 = vpop.f32.mrf.mxu0
    %432 = vmatprep.mubr.f32.mxu0 0.0
    %433 = vmatmul.mubr.f32.gmra.mxu0 %v345
    %v434 = vpop.f32.mrf.mxu0
    %v435 = vadd.f32 %v333, %v434
    %v436 = vpop.f32.mrf.mxu0
    %437 = vmatprep.mubr.f32.mxu0 0.0
    %438 = vmatmul.mubr.f32.gmra.mxu0 %v348
    %v439 = vpop.f32.mrf.mxu0
    %v440 = vadd.f32 %v333, %v439
    %v441 = vpop.f32.mrf.mxu0
    %442 = vmatprep.mubr.f32.mxu0 0.0
    %443 = vmatmul.mubr.f32.gmra.mxu0 %v351
    %v444 = vpop.f32.mrf.mxu0
    %v445 = vadd.f32 %v333, %v444
    %v446 = vpop.f32.mrf.mxu0
    %447 = vdwg.mxu0
    %v448 = vmul.f32 %v420, 0.17677669
    %v449 = vmul.f32 %v425, 0.17677669
    %v450 = vmul.f32 %v430, 0.17677669
    %v451 = vmul.f32 %v435, 0.17677669
    %v452 = vmul.f32 %v440, 0.17677669
    %v453 = vmul.f32 %v445, 0.17677669
    %v454 = vld [vmem:[%s11] sm:$0xff]
    %v455 = vld [vmem:[%s11 + $0x8] sm:$0xff]
    %v456 = vld [vmem:[%s11 + $0x10] sm:$0xff]
    %v457 = vld [vmem:[%s11 + $0x18] sm:$0xff]
    %v458 = vld [vmem:[%s12] sm:$0x1]
    %v460 = vlaneseq
    %v461 = vshrl.u32 %v460, 7
    %v462 = vsub.s32 0, %v461
    %v463 = vrot.slane %v458, %v462
    %465 = vmatprep.subr.mxu0 0.0
    %466 = vmatpush1.msra.mxu0 0.0
    %467 = vmatprep.subr.mxu0 0.0
    %468 = vmatpush1.msra.mxu0 0.0
    %469 = vmatprep.subr.mxu0 0.0
    %470 = vmatpush1.msra.mxu0 0.0
    %471 = vmatprep.subr.mxu0 0.0
    %472 = vmatpush1.msra.mxu0 0.0
    %473 = vmatprep.subr.mxu0 0.0
    %474 = vmatpush1.msra.mxu0 0.0
    %475 = vmatprep.subr.mxu0 0.0
    %476 = vmatpush1.msra.mxu0 0.0
    %477 = vmatprep.subr.mxu0 0.0
    %478 = vmatpush1.msra.mxu0 0.0
    %479 = vmatprep.subr.mxu0 0.0
    %480 = vmatpush1.msra.mxu0 0.0
    %481 = vmatprep.subr.mxu0 0.0
    %482 = vmatpush1.msra.mxu0 0.0
    %483 = vmatprep.subr.mxu0 0.0
    %484 = vmatpush1.msra.mxu0 0.0
    %485 = vmatprep.subr.mxu0 0.0
    %486 = vmatpush1.msra.mxu0 0.0
    %487 = vmatprep.subr.mxu0 0.0
    %488 = vmatpush1.msra.mxu0 0.0
    %489 = vmatprep.subr.mxu0 0.0
    %490 = vmatpush1.msra.mxu0 %v457
    %491 = vmatprep.subr.mxu0 0.0
    %492 = vmatpush1.msra.mxu0 %v456
    %493 = vmatprep.subr.mxu0 0.0
    %494 = vmatpush1.msra.mxu0 %v455
    %495 = vmatprep.subr.mxu0 0.0
    %496 = vmatpush1.msra.mxu0 %v454
    %497 = vmatprep.subr.mxu0 0.0
    %498 = vmatpush2.msra.mxu0 0.0
    %499 = vmatprep.subr.mxu0 0.0
    %500 = vmatpush2.msra.mxu0 0.0
    %501 = vmatprep.subr.mxu0 0.0
    %502 = vmatpush2.msra.mxu0 0.0
    %503 = vmatprep.subr.mxu0 0.0
    %504 = vmatpush2.msra.mxu0 0.0
    %505 = vmatprep.subr.mxu0 0.0
    %506 = vmatpush2.msra.mxu0 0.0
    %507 = vmatprep.subr.mxu0 0.0
    %508 = vmatpush2.msra.mxu0 0.0
    %509 = vmatprep.subr.mxu0 0.0
    %510 = vmatpush2.msra.mxu0 0.0
    %511 = vmatprep.subr.mxu0 0.0
    %512 = vmatpush2.msra.mxu0 0.0
    %513 = vmatprep.subr.mxu0 0.0
    %514 = vmatpush2.msra.mxu0 0.0
    %515 = vmatprep.subr.mxu0 0.0
    %516 = vmatpush2.msra.mxu0 0.0
    %517 = vmatprep.subr.mxu0 0.0
    %518 = vmatpush2.msra.mxu0 0.0
    %519 = vmatprep.subr.mxu0 0.0
    %520 = vmatpush2.msra.mxu0 0.0
    %521 = vmatprep.subr.mxu0 0.0
    %522 = vmatpush2.msra.mxu0 0.0
    %523 = vmatprep.subr.mxu0 0.0
    %524 = vmatpush2.msra.mxu0 0.0
    %525 = vmatprep.subr.mxu0 0.0
    %526 = vmatpush2.msra.mxu0 0.0
    %527 = vmatprep.subr.mxu0 0.0
    %528 = vmatpush2.msra.mxu0 0.0
    %529 = vmatprep.mubr.f32.mxu0 0.0
    %530 = vmatmul.mubr.f32.gmra.mxu0 %v336
    %v531 = vpop.f32.mrf.mxu0
    %v532 = vadd.f32 %v463, %v531
    %v533 = vpop.f32.mrf.mxu0
    %534 = vmatprep.mubr.f32.mxu0 0.0
    %535 = vmatmul.mubr.f32.gmra.mxu0 %v339
    %v536 = vpop.f32.mrf.mxu0
    %v537 = vadd.f32 %v463, %v536
    %v538 = vpop.f32.mrf.mxu0
    %539 = vmatprep.mubr.f32.mxu0 0.0
    %540 = vmatmul.mubr.f32.gmra.mxu0 %v342
    %v541 = vpop.f32.mrf.mxu0
    %v542 = vadd.f32 %v463, %v541
    %v543 = vpop.f32.mrf.mxu0
    %544 = vmatprep.mubr.f32.mxu0 0.0
    %545 = vmatmul.mubr.f32.gmra.mxu0 %v345
    %v546 = vpop.f32.mrf.mxu0
    %v547 = vadd.f32 %v463, %v546
    %v548 = vpop.f32.mrf.mxu0
    %549 = vmatprep.mubr.f32.mxu0 0.0
    %550 = vmatmul.mubr.f32.gmra.mxu0 %v348
    %v551 = vpop.f32.mrf.mxu0
    %v552 = vadd.f32 %v463, %v551
    %v553 = vpop.f32.mrf.mxu0
    %554 = vmatprep.mubr.f32.mxu0 0.0
    %555 = vmatmul.mubr.f32.gmra.mxu0 %v351
    %v556 = vpop.f32.mrf.mxu0
    %v557 = vadd.f32 %v463, %v556
    %v558 = vpop.f32.mrf.mxu0
    %559 = vdwg.mxu0
    %v560 = vld [vmem:[%s13] sm:$0xff]
    %v561 = vld [vmem:[%s13 + $0x8] sm:$0xff]
    %v562 = vld [vmem:[%s13 + $0x10] sm:$0xff]
    %v563 = vld [vmem:[%s13 + $0x18] sm:$0xff]
    %v564 = vld [vmem:[%s14] sm:$0x1]
    %v566 = vlaneseq
    %v567 = vshrl.u32 %v566, 7
    %v568 = vsub.s32 0, %v567
    %v569 = vrot.slane %v564, %v568
    %571 = vmatprep.subr.mxu0 0.0
    %572 = vmatpush1.msra.mxu0 0.0
    %573 = vmatprep.subr.mxu0 0.0
    %574 = vmatpush1.msra.mxu0 0.0
    %575 = vmatprep.subr.mxu0 0.0
    %576 = vmatpush1.msra.mxu0 0.0
    %577 = vmatprep.subr.mxu0 0.0
    %578 = vmatpush1.msra.mxu0 0.0
    %579 = vmatprep.subr.mxu0 0.0
    %580 = vmatpush1.msra.mxu0 0.0
    %581 = vmatprep.subr.mxu0 0.0
    %582 = vmatpush1.msra.mxu0 0.0
    %583 = vmatprep.subr.mxu0 0.0
    %584 = vmatpush1.msra.mxu0 0.0
    %585 = vmatprep.subr.mxu0 0.0
    %586 = vmatpush1.msra.mxu0 0.0
    %587 = vmatprep.subr.mxu0 0.0
    %588 = vmatpush1.msra.mxu0 0.0
    %589 = vmatprep.subr.mxu0 0.0
    %590 = vmatpush1.msra.mxu0 0.0
    %591 = vmatprep.subr.mxu0 0.0
    %592 = vmatpush1.msra.mxu0 0.0
    %593 = vmatprep.subr.mxu0 0.0
    %594 = vmatpush1.msra.mxu0 0.0
    %595 = vmatprep.subr.mxu0 0.0
    %596 = vmatpush1.msra.mxu0 %v563
    %597 = vmatprep.subr.mxu0 0.0
    %598 = vmatpush1.msra.mxu0 %v562
    %599 = vmatprep.subr.mxu0 0.0
    %600 = vmatpush1.msra.mxu0 %v561
    %601 = vmatprep.subr.mxu0 0.0
    %602 = vmatpush1.msra.mxu0 %v560
    %603 = vmatprep.subr.mxu0 0.0
    %604 = vmatpush2.msra.mxu0 0.0
    %605 = vmatprep.subr.mxu0 0.0
    %606 = vmatpush2.msra.mxu0 0.0
    %607 = vmatprep.subr.mxu0 0.0
    %608 = vmatpush2.msra.mxu0 0.0
    %609 = vmatprep.subr.mxu0 0.0
    %610 = vmatpush2.msra.mxu0 0.0
    %611 = vmatprep.subr.mxu0 0.0
    %612 = vmatpush2.msra.mxu0 0.0
    %613 = vmatprep.subr.mxu0 0.0
    %614 = vmatpush2.msra.mxu0 0.0
    %615 = vmatprep.subr.mxu0 0.0
    %616 = vmatpush2.msra.mxu0 0.0
    %617 = vmatprep.subr.mxu0 0.0
    %618 = vmatpush2.msra.mxu0 0.0
    %619 = vmatprep.subr.mxu0 0.0
    %620 = vmatpush2.msra.mxu0 0.0
    %621 = vmatprep.subr.mxu0 0.0
    %622 = vmatpush2.msra.mxu0 0.0
    %623 = vmatprep.subr.mxu0 0.0
    %624 = vmatpush2.msra.mxu0 0.0
    %625 = vmatprep.subr.mxu0 0.0
    %626 = vmatpush2.msra.mxu0 0.0
    %627 = vmatprep.subr.mxu0 0.0
    %628 = vmatpush2.msra.mxu0 0.0
    %629 = vmatprep.subr.mxu0 0.0
    %630 = vmatpush2.msra.mxu0 0.0
    %631 = vmatprep.subr.mxu0 0.0
    %632 = vmatpush2.msra.mxu0 0.0
    %633 = vmatprep.subr.mxu0 0.0
    %634 = vmatpush2.msra.mxu0 0.0
    %635 = vmatprep.mubr.f32.mxu0 0.0
    %636 = vmatmul.mubr.f32.gmra.mxu0 %v336
    %v637 = vpop.f32.mrf.mxu0
    %v638 = vadd.f32 %v569, %v637
    %v639 = vpop.f32.mrf.mxu0
    %640 = vmatprep.mubr.f32.mxu0 0.0
    %641 = vmatmul.mubr.f32.gmra.mxu0 %v339
    %v642 = vpop.f32.mrf.mxu0
    %v643 = vadd.f32 %v569, %v642
    %v644 = vpop.f32.mrf.mxu0
    %645 = vmatprep.mubr.f32.mxu0 0.0
    %646 = vmatmul.mubr.f32.gmra.mxu0 %v342
    %v647 = vpop.f32.mrf.mxu0
    %v648 = vadd.f32 %v569, %v647
    %v649 = vpop.f32.mrf.mxu0
    %650 = vmatprep.mubr.f32.mxu0 0.0
    %651 = vmatmul.mubr.f32.gmra.mxu0 %v345
    %v652 = vpop.f32.mrf.mxu0
    %v653 = vadd.f32 %v569, %v652
    %v654 = vpop.f32.mrf.mxu0
    %655 = vmatprep.mubr.f32.mxu0 0.0
    %656 = vmatmul.mubr.f32.gmra.mxu0 %v348
    %v657 = vpop.f32.mrf.mxu0
    %v658 = vadd.f32 %v569, %v657
    %v659 = vpop.f32.mrf.mxu0
    %660 = vmatprep.mubr.f32.mxu0 0.0
    %661 = vmatmul.mubr.f32.gmra.mxu0 %v351
    %v662 = vpop.f32.mrf.mxu0
    %v663 = vadd.f32 %v569, %v662
    %v664 = vpop.f32.mrf.mxu0
    %665 = vdwg.mxu0
    %v666 = vld [vmem:[%s2] sm:$0xff]
    %v667 = vld [vmem:[%s2 + $0x8] sm:$0xff]
    %v668 = vld [vmem:[%s2 + $0x10] sm:$0xff]
    %v669 = vld [vmem:[%s2 + $0x18] sm:$0xff]
    %v670 = vld [vmem:[%s2 + $0x20] sm:$0xff]
    %v671 = vld [vmem:[%s2 + $0x28] sm:$0xff]
    %v673 = vsel %vm196, %v448, 0
    %v676 = vsel %vm196, %v449, 0
    %v679 = vsel %vm196, %v450, 0
    %v682 = vsel %vm196, %v451, 0
    %v685 = vsel %vm196, %v452, 0
    %v688 = vsel %vm196, %v453, 0
    %v691 = vsel %vm196, %v532, 0
    %v694 = vsel %vm196, %v537, 0
    %v697 = vsel %vm196, %v542, 0
    %v700 = vsel %vm196, %v547, 0
    %v703 = vsel %vm196, %v552, 0
    %v706 = vsel %vm196, %v557, 0
    %708 = vmatprep.subr.mxu0 0.0
    %709 = vmatpush1.xpose.msra.mxu0 0.0
    %710 = vmatprep.subr.mxu0 0.0
    %711 = vmatpush1.xpose.msra.mxu0 0.0
    %712 = vmatprep.subr.mxu0 0.0
    %713 = vmatpush1.xpose.msra.mxu0 0.0
    %714 = vmatprep.subr.mxu0 0.0
    %715 = vmatpush1.xpose.msra.mxu0 0.0
    %716 = vmatprep.subr.mxu0 0.0
    %717 = vmatpush1.xpose.msra.mxu0 0.0
    %718 = vmatprep.subr.mxu0 0.0
    %719 = vmatpush1.xpose.msra.mxu0 0.0
    %720 = vmatprep.subr.mxu0 0.0
    %721 = vmatpush1.xpose.msra.mxu0 0.0
    %722 = vmatprep.subr.mxu0 0.0
    %723 = vmatpush1.xpose.msra.mxu0 0.0
    %724 = vmatprep.subr.mxu0 0.0
    %725 = vmatpush1.xpose.msra.mxu0 0.0
    %726 = vmatprep.subr.mxu0 0.0
    %727 = vmatpush1.xpose.msra.mxu0 0.0
    %728 = vmatprep.subr.mxu0 0.0
    %729 = vmatpush1.xpose.msra.mxu0 %v706
    %730 = vmatprep.subr.mxu0 0.0
    %731 = vmatpush1.xpose.msra.mxu0 %v703
    %732 = vmatprep.subr.mxu0 0.0
    %733 = vmatpush1.xpose.msra.mxu0 %v700
    %734 = vmatprep.subr.mxu0 0.0
    %735 = vmatpush1.xpose.msra.mxu0 %v697
    %736 = vmatprep.subr.mxu0 0.0
    %737 = vmatpush1.xpose.msra.mxu0 %v694
    %738 = vmatprep.subr.mxu0 0.0
    %739 = vmatpush1.xpose.msra.mxu0 %v691
    %740 = vmatprep.subr.mxu0 0.0
    %741 = vmatpush2.xpose.msra.mxu0 0.0
    %742 = vmatprep.subr.mxu0 0.0
    %743 = vmatpush2.xpose.msra.mxu0 0.0
    %744 = vmatprep.subr.mxu0 0.0
    %745 = vmatpush2.xpose.msra.mxu0 0.0
    %746 = vmatprep.subr.mxu0 0.0
    %747 = vmatpush2.xpose.msra.mxu0 0.0
    %748 = vmatprep.subr.mxu0 0.0
    %749 = vmatpush2.xpose.msra.mxu0 0.0
    %750 = vmatprep.subr.mxu0 0.0
    %751 = vmatpush2.xpose.msra.mxu0 0.0
    %752 = vmatprep.subr.mxu0 0.0
    %753 = vmatpush2.xpose.msra.mxu0 0.0
    %754 = vmatprep.subr.mxu0 0.0
    %755 = vmatpush2.xpose.msra.mxu0 0.0
    %756 = vmatprep.subr.mxu0 0.0
    %757 = vmatpush2.xpose.msra.mxu0 0.0
    %758 = vmatprep.subr.mxu0 0.0
    %759 = vmatpush2.xpose.msra.mxu0 0.0
    %760 = vmatprep.subr.mxu0 0.0
    %761 = vmatpush2.xpose.msra.mxu0 0.0
    %762 = vmatprep.subr.mxu0 0.0
    %763 = vmatpush2.xpose.msra.mxu0 0.0
    %764 = vmatprep.subr.mxu0 0.0
    %765 = vmatpush2.xpose.msra.mxu0 0.0
    %766 = vmatprep.subr.mxu0 0.0
    %767 = vmatpush2.xpose.msra.mxu0 0.0
    %768 = vmatprep.subr.mxu0 0.0
    %769 = vmatpush2.xpose.msra.mxu0 0.0
    %770 = vmatprep.subr.mxu0 0.0
    %771 = vmatpush2.xpose.msra.mxu0 0.0
    %772 = vmatprep.mubr.f32.mxu0 0.0
    %773 = vmatmul.mubr.f32.gmra.mxu0 %v673
    %v774 = vpop.f32.mrf.mxu0
    %v775 = vadd.f32 %v666, %v774
    %v776 = vpop.f32.mrf.mxu0
    %777 = vmatprep.mubr.f32.mxu0 0.0
    %778 = vmatmul.mubr.f32.gmra.mxu0 %v676
    %v779 = vpop.f32.mrf.mxu0
    %v780 = vadd.f32 %v667, %v779
    %v781 = vpop.f32.mrf.mxu0
    %782 = vmatprep.mubr.f32.mxu0 0.0
    %783 = vmatmul.mubr.f32.gmra.mxu0 %v679
    %v784 = vpop.f32.mrf.mxu0
    %v785 = vadd.f32 %v668, %v784
    %v786 = vpop.f32.mrf.mxu0
    %787 = vmatprep.mubr.f32.mxu0 0.0
    %788 = vmatmul.mubr.f32.gmra.mxu0 %v682
    %v789 = vpop.f32.mrf.mxu0
    %v790 = vadd.f32 %v669, %v789
    %v791 = vpop.f32.mrf.mxu0
    %792 = vmatprep.mubr.f32.mxu0 0.0
    %793 = vmatmul.mubr.f32.gmra.mxu0 %v685
    %v794 = vpop.f32.mrf.mxu0
    %v795 = vadd.f32 %v670, %v794
    %v796 = vpop.f32.mrf.mxu0
    %797 = vmatprep.mubr.f32.mxu0 0.0
    %798 = vmatmul.mubr.f32.gmra.mxu0 %v688
    %v799 = vpop.f32.mrf.mxu0
    %v800 = vadd.f32 %v671, %v799
    %v801 = vpop.f32.mrf.mxu0
    %802 = vdwg.mxu0
    %vm803 = vcmask 392192
    %v804 = vsel %vm803, %v775, -inf
    %805 = vmax.xlane.f32.xlu0 %v804
    %v806 = vpop.xlane.xlu0 %805
    %v807 = vsel %vm803, %v780, -inf
    %808 = vmax.xlane.f32.xlu0 %v807
    %v809 = vpop.xlane.xlu0 %808
    %v810 = vsel %vm803, %v785, -inf
    %811 = vmax.xlane.f32.xlu0 %v810
    %v812 = vpop.xlane.xlu0 %811
    %v813 = vsel %vm803, %v790, -inf
    %814 = vmax.xlane.f32.xlu0 %v813
    %v815 = vpop.xlane.xlu0 %814
    %v816 = vsel %vm803, %v795, -inf
    %817 = vmax.xlane.f32.xlu0 %v816
    %v818 = vpop.xlane.xlu0 %817
    %v819 = vsel %vm803, %v800, -inf
    %820 = vmax.xlane.f32.xlu0 %v819
    %v821 = vpop.xlane.xlu0 %820
    %v822 = vsub.f32 %v775, %v806
    %v823 = vsub.f32 %v780, %v809
    %v824 = vsub.f32 %v785, %v812
    %v825 = vsub.f32 %v790, %v815
    %v826 = vsub.f32 %v795, %v818
    %v827 = vsub.f32 %v800, %v821
    %v828 = vmul.f32 %v822, 1.442695
    %v829 = vpow.pop %v828
    %v830 = vmul.f32 %v823, 1.442695
    %v831 = vpow.pop %v830
    %v832 = vmul.f32 %v824, 1.442695
    %v833 = vpow.pop %v832
    %v834 = vmul.f32 %v825, 1.442695
    %v835 = vpow.pop %v834
    %v836 = vmul.f32 %v826, 1.442695
    %v837 = vpow.pop %v836
    %v838 = vmul.f32 %v827, 1.442695
    %v839 = vpow.pop %v838
    %v840 = vsel %vm803, %v829, 0.0
    %841 = vadd.xlane.f32.xlu0 %v840
    %v842 = vpop.xlane.xlu0 %841
    %v843 = vsel %vm803, %v831, 0.0
    %844 = vadd.xlane.f32.xlu0 %v843
    %v845 = vpop.xlane.xlu0 %844
    %v846 = vsel %vm803, %v833, 0.0
    %847 = vadd.xlane.f32.xlu0 %v846
    %v848 = vpop.xlane.xlu0 %847
    %v849 = vsel %vm803, %v835, 0.0
    %850 = vadd.xlane.f32.xlu0 %v849
    %v851 = vpop.xlane.xlu0 %850
    %v852 = vsel %vm803, %v837, 0.0
    %853 = vadd.xlane.f32.xlu0 %v852
    %v854 = vpop.xlane.xlu0 %853
    %v855 = vsel %vm803, %v839, 0.0
    %856 = vadd.xlane.f32.xlu0 %v855
    %v857 = vpop.xlane.xlu0 %856
    %v858 = vrcp.pop %v842
    %v859 = vrcp.pop %v845
    %v860 = vrcp.pop %v848
    %v861 = vrcp.pop %v851
    %v862 = vrcp.pop %v854
    %v863 = vrcp.pop %v857
    %v864 = vmul.f32 %v829, %v858
    %v865 = vmul.f32 %v831, %v859
    %v866 = vmul.f32 %v833, %v860
    %v867 = vmul.f32 %v835, %v861
    %v868 = vmul.f32 %v837, %v862
    %v869 = vmul.f32 %v839, %v863
    %v871 = vsel %vm803, %v864, 0
    %v874 = vsel %vm803, %v865, 0
    %v877 = vsel %vm803, %v866, 0
    %v880 = vsel %vm803, %v867, 0
    %v883 = vsel %vm803, %v868, 0
    %v886 = vsel %vm803, %v869, 0
    %888 = vmatprep.subr.mxu0 0.0
    %889 = vmatpush1.msra.mxu0 0.0
    %890 = vmatprep.subr.mxu0 0.0
    %891 = vmatpush1.msra.mxu0 0.0
    %892 = vmatprep.subr.mxu0 0.0
    %893 = vmatpush1.msra.mxu0 0.0
    %894 = vmatprep.subr.mxu0 0.0
    %895 = vmatpush1.msra.mxu0 0.0
    %896 = vmatprep.subr.mxu0 0.0
    %897 = vmatpush1.msra.mxu0 0.0
    %898 = vmatprep.subr.mxu0 0.0
    %899 = vmatpush1.msra.mxu0 0.0
    %900 = vmatprep.subr.mxu0 0.0
    %901 = vmatpush1.msra.mxu0 0.0
    %902 = vmatprep.subr.mxu0 0.0
    %903 = vmatpush1.msra.mxu0 0.0
    %904 = vmatprep.subr.mxu0 0.0
    %905 = vmatpush1.msra.mxu0 0.0
    %906 = vmatprep.subr.mxu0 0.0
    %907 = vmatpush1.msra.mxu0 0.0
    %908 = vmatprep.subr.mxu0 0.0
    %909 = vmatpush1.msra.mxu0 %v663
    %910 = vmatprep.subr.mxu0 0.0
    %911 = vmatpush1.msra.mxu0 %v658
    %912 = vmatprep.subr.mxu0 0.0
    %913 = vmatpush1.msra.mxu0 %v653
    %914 = vmatprep.subr.mxu0 0.0
    %915 = vmatpush1.msra.mxu0 %v648
    %916 = vmatprep.subr.mxu0 0.0
    %917 = vmatpush1.msra.mxu0 %v643
    %918 = vmatprep.subr.mxu0 0.0
    %919 = vmatpush1.msra.mxu0 %v638
    %920 = vmatprep.subr.mxu0 0.0
    %921 = vmatpush2.msra.mxu0 0.0
    %922 = vmatprep.subr.mxu0 0.0
    %923 = vmatpush2.msra.mxu0 0.0
    %924 = vmatprep.subr.mxu0 0.0
    %925 = vmatpush2.msra.mxu0 0.0
    %926 = vmatprep.subr.mxu0 0.0
    %927 = vmatpush2.msra.mxu0 0.0
    %928 = vmatprep.subr.mxu0 0.0
    %929 = vmatpush2.msra.mxu0 0.0
    %930 = vmatprep.subr.mxu0 0.0
    %931 = vmatpush2.msra.mxu0 0.0
    %932 = vmatprep.subr.mxu0 0.0
    %933 = vmatpush2.msra.mxu0 0.0
    %934 = vmatprep.subr.mxu0 0.0
    %935 = vmatpush2.msra.mxu0 0.0
    %936 = vmatprep.subr.mxu0 0.0
    %937 = vmatpush2.msra.mxu0 0.0
    %938 = vmatprep.subr.mxu0 0.0
    %939 = vmatpush2.msra.mxu0 0.0
    %940 = vmatprep.subr.mxu0 0.0
    %941 = vmatpush2.msra.mxu0 0.0
    %942 = vmatprep.subr.mxu0 0.0
    %943 = vmatpush2.msra.mxu0 0.0
    %944 = vmatprep.subr.mxu0 0.0
    %945 = vmatpush2.msra.mxu0 0.0
    %946 = vmatprep.subr.mxu0 0.0
    %947 = vmatpush2.msra.mxu0 0.0
    %948 = vmatprep.subr.mxu0 0.0
    %949 = vmatpush2.msra.mxu0 0.0
    %950 = vmatprep.subr.mxu0 0.0
    %951 = vmatpush2.msra.mxu0 0.0
    %952 = vmatprep.mubr.f32.mxu0 0.0
    %953 = vmatmul.mubr.f32.gmra.mxu0 %v871
    %v954 = vpop.f32.mrf.mxu0
    %v955 = vadd.f32 0.0, %v954
    %v956 = vpop.f32.mrf.mxu0
    %957 = vmatprep.mubr.f32.mxu0 0.0
    %958 = vmatmul.mubr.f32.gmra.mxu0 %v874
    %v959 = vpop.f32.mrf.mxu0
    %v960 = vadd.f32 0.0, %v959
    %v961 = vpop.f32.mrf.mxu0
    %962 = vmatprep.mubr.f32.mxu0 0.0
    %963 = vmatmul.mubr.f32.gmra.mxu0 %v877
    %v964 = vpop.f32.mrf.mxu0
    %v965 = vadd.f32 0.0, %v964
    %v966 = vpop.f32.mrf.mxu0
    %967 = vmatprep.mubr.f32.mxu0 0.0
    %968 = vmatmul.mubr.f32.gmra.mxu0 %v880
    %v969 = vpop.f32.mrf.mxu0
    %v970 = vadd.f32 0.0, %v969
    %v971 = vpop.f32.mrf.mxu0
    %972 = vmatprep.mubr.f32.mxu0 0.0
    %973 = vmatmul.mubr.f32.gmra.mxu0 %v883
    %v974 = vpop.f32.mrf.mxu0
    %v975 = vadd.f32 0.0, %v974
    %v976 = vpop.f32.mrf.mxu0
    %977 = vmatprep.mubr.f32.mxu0 0.0
    %978 = vmatmul.mubr.f32.gmra.mxu0 %v886
    %v979 = vpop.f32.mrf.mxu0
    %v980 = vadd.f32 0.0, %v979
    %v981 = vpop.f32.mrf.mxu0
    %982 = vdwg.mxu0
    %v983 = vld [vmem:[%s15] sm:$0xff]
    %v984 = vld [vmem:[%s15 + $0x8] sm:$0xff]
    %v985 = vld [vmem:[%s15 + $0x10] sm:$0xff]
    %v986 = vld [vmem:[%s15 + $0x18] sm:$0xff]
    %v987 = vld [vmem:[%s16] sm:$0x1]
    %v989 = vlaneseq
    %v990 = vshrl.u32 %v989, 7
    %v991 = vsub.s32 0, %v990
    %v992 = vrot.slane %v987, %v991
    %v995 = vsel %vm196, %v955, 0
    %v998 = vsel %vm196, %v960, 0
    %v1001 = vsel %vm196, %v965, 0
    %v1004 = vsel %vm196, %v970, 0
    %v1007 = vsel %vm196, %v975, 0
    %v1010 = vsel %vm196, %v980, 0
    %1012 = vmatprep.subr.mxu0 0.0
    %1013 = vmatpush1.msra.mxu0 0.0
    %1014 = vmatprep.subr.mxu0 0.0
    %1015 = vmatpush1.msra.mxu0 0.0
    %1016 = vmatprep.subr.mxu0 0.0
    %1017 = vmatpush1.msra.mxu0 0.0
    %1018 = vmatprep.subr.mxu0 0.0
    %1019 = vmatpush1.msra.mxu0 0.0
    %1020 = vmatprep.subr.mxu0 0.0
    %1021 = vmatpush1.msra.mxu0 0.0
    %1022 = vmatprep.subr.mxu0 0.0
    %1023 = vmatpush1.msra.mxu0 0.0
    %1024 = vmatprep.subr.mxu0 0.0
    %1025 = vmatpush1.msra.mxu0 0.0
    %1026 = vmatprep.subr.mxu0 0.0
    %1027 = vmatpush1.msra.mxu0 0.0
    %1028 = vmatprep.subr.mxu0 0.0
    %1029 = vmatpush1.msra.mxu0 0.0
    %1030 = vmatprep.subr.mxu0 0.0
    %1031 = vmatpush1.msra.mxu0 0.0
    %1032 = vmatprep.subr.mxu0 0.0
    %1033 = vmatpush1.msra.mxu0 0.0
    %1034 = vmatprep.subr.mxu0 0.0
    %1035 = vmatpush1.msra.mxu0 0.0
    %1036 = vmatprep.subr.mxu0 0.0
    %1037 = vmatpush1.msra.mxu0 %v986
    %1038 = vmatprep.subr.mxu0 0.0
    %1039 = vmatpush1.msra.mxu0 %v985
    %1040 = vmatprep.subr.mxu0 0.0
    %1041 = vmatpush1.msra.mxu0 %v984
    %1042 = vmatprep.subr.mxu0 0.0
    %1043 = vmatpush1.msra.mxu0 %v983
    %1044 = vmatprep.subr.mxu0 0.0
    %1045 = vmatpush2.msra.mxu0 0.0
    %1046 = vmatprep.subr.mxu0 0.0
    %1047 = vmatpush2.msra.mxu0 0.0
    %1048 = vmatprep.subr.mxu0 0.0
    %1049 = vmatpush2.msra.mxu0 0.0
    %1050 = vmatprep.subr.mxu0 0.0
    %1051 = vmatpush2.msra.mxu0 0.0
    %1052 = vmatprep.subr.mxu0 0.0
    %1053 = vmatpush2.msra.mxu0 0.0
    %1054 = vmatprep.subr.mxu0 0.0
    %1055 = vmatpush2.msra.mxu0 0.0
    %1056 = vmatprep.subr.mxu0 0.0
    %1057 = vmatpush2.msra.mxu0 0.0
    %1058 = vmatprep.subr.mxu0 0.0
    %1059 = vmatpush2.msra.mxu0 0.0
    %1060 = vmatprep.subr.mxu0 0.0
    %1061 = vmatpush2.msra.mxu0 0.0
    %1062 = vmatprep.subr.mxu0 0.0
    %1063 = vmatpush2.msra.mxu0 0.0
    %1064 = vmatprep.subr.mxu0 0.0
    %1065 = vmatpush2.msra.mxu0 0.0
    %1066 = vmatprep.subr.mxu0 0.0
    %1067 = vmatpush2.msra.mxu0 0.0
    %1068 = vmatprep.subr.mxu0 0.0
    %1069 = vmatpush2.msra.mxu0 0.0
    %1070 = vmatprep.subr.mxu0 0.0
    %1071 = vmatpush2.msra.mxu0 0.0
    %1072 = vmatprep.subr.mxu0 0.0
    %1073 = vmatpush2.msra.mxu0 0.0
    %1074 = vmatprep.subr.mxu0 0.0
    %1075 = vmatpush2.msra.mxu0 0.0
    %1076 = vmatprep.mubr.f32.mxu0 0.0
    %1077 = vmatmul.mubr.f32.gmra.mxu0 %v995
    %v1078 = vpop.f32.mrf.mxu0
    %v1079 = vadd.f32 %v992, %v1078
    %v1080 = vpop.f32.mrf.mxu0
    %1081 = vmatprep.mubr.f32.mxu0 0.0
    %1082 = vmatmul.mubr.f32.gmra.mxu0 %v998
    %v1083 = vpop.f32.mrf.mxu0
    %v1084 = vadd.f32 %v992, %v1083
    %v1085 = vpop.f32.mrf.mxu0
    %1086 = vmatprep.mubr.f32.mxu0 0.0
    %1087 = vmatmul.mubr.f32.gmra.mxu0 %v1001
    %v1088 = vpop.f32.mrf.mxu0
    %v1089 = vadd.f32 %v992, %v1088
    %v1090 = vpop.f32.mrf.mxu0
    %1091 = vmatprep.mubr.f32.mxu0 0.0
    %1092 = vmatmul.mubr.f32.gmra.mxu0 %v1004
    %v1093 = vpop.f32.mrf.mxu0
    %v1094 = vadd.f32 %v992, %v1093
    %v1095 = vpop.f32.mrf.mxu0
    %1096 = vmatprep.mubr.f32.mxu0 0.0
    %1097 = vmatmul.mubr.f32.gmra.mxu0 %v1007
    %v1098 = vpop.f32.mrf.mxu0
    %v1099 = vadd.f32 %v992, %v1098
    %v1100 = vpop.f32.mrf.mxu0
    %1101 = vmatprep.mubr.f32.mxu0 0.0
    %1102 = vmatmul.mubr.f32.gmra.mxu0 %v1010
    %v1103 = vpop.f32.mrf.mxu0
    %v1104 = vadd.f32 %v992, %v1103
    %v1105 = vpop.f32.mrf.mxu0
    %1106 = vdwg.mxu0
    %v1107 = vadd.f32 %v213, %v1079
    %v1108 = vadd.f32 %v214, %v1084
    %v1109 = vadd.f32 %v215, %v1089
    %v1110 = vadd.f32 %v216, %v1094
    %v1111 = vadd.f32 %v217, %v1099
    %v1112 = vadd.f32 %v218, %v1104
    %v1113 = vld [vmem:[%s17] sm:$0x1]
    %v1114 = vld [vmem:[%s18] sm:$0x1]
    %v1115 = vsel %vm196, %v1107, 0.0
    %1116 = vadd.xlane.f32.xlu0 %v1115
    %v1117 = vpop.xlane.xlu0 %1116
    %v1118 = vsel %vm196, %v1108, 0.0
    %1119 = vadd.xlane.f32.xlu0 %v1118
    %v1120 = vpop.xlane.xlu0 %1119
    %v1121 = vsel %vm196, %v1109, 0.0
    %1122 = vadd.xlane.f32.xlu0 %v1121
    %v1123 = vpop.xlane.xlu0 %1122
    %v1124 = vsel %vm196, %v1110, 0.0
    %1125 = vadd.xlane.f32.xlu0 %v1124
    %v1126 = vpop.xlane.xlu0 %1125
    %v1127 = vsel %vm196, %v1111, 0.0
    %1128 = vadd.xlane.f32.xlu0 %v1127
    %v1129 = vpop.xlane.xlu0 %1128
    %v1130 = vsel %vm196, %v1112, 0.0
    %1131 = vadd.xlane.f32.xlu0 %v1130
    %v1132 = vpop.xlane.xlu0 %1131
    %v1133 = vmul.f32 %v1117, %v239
    %v1134 = vmul.f32 %v1120, %v239
    %v1135 = vmul.f32 %v1123, %v239
    %v1136 = vmul.f32 %v1126, %v239
    %v1137 = vmul.f32 %v1129, %v239
    %v1138 = vmul.f32 %v1132, %v239
    %v1139 = vsub.f32 %v1107, %v1133
    %v1140 = vsub.f32 %v1108, %v1134
    %v1141 = vsub.f32 %v1109, %v1135
    %v1142 = vsub.f32 %v1110, %v1136
    %v1143 = vsub.f32 %v1111, %v1137
    %v1144 = vsub.f32 %v1112, %v1138
    %v1145 = vmul.f32 %v1139, %v1139
    %v1146 = vmul.f32 %v1140, %v1140
    %v1147 = vmul.f32 %v1141, %v1141
    %v1148 = vmul.f32 %v1142, %v1142
    %v1149 = vmul.f32 %v1143, %v1143
    %v1150 = vmul.f32 %v1144, %v1144
    %v1151 = vsel %vm196, %v1145, 0.0
    %1152 = vadd.xlane.f32.xlu0 %v1151
    %v1153 = vpop.xlane.xlu0 %1152
    %v1154 = vsel %vm196, %v1146, 0.0
    %1155 = vadd.xlane.f32.xlu0 %v1154
    %v1156 = vpop.xlane.xlu0 %1155
    %v1157 = vsel %vm196, %v1147, 0.0
    %1158 = vadd.xlane.f32.xlu0 %v1157
    %v1159 = vpop.xlane.xlu0 %1158
    %v1160 = vsel %vm196, %v1148, 0.0
    %1161 = vadd.xlane.f32.xlu0 %v1160
    %v1162 = vpop.xlane.xlu0 %1161
    %v1163 = vsel %vm196, %v1149, 0.0
    %1164 = vadd.xlane.f32.xlu0 %v1163
    %v1165 = vpop.xlane.xlu0 %1164
    %v1166 = vsel %vm196, %v1150, 0.0
    %1167 = vadd.xlane.f32.xlu0 %v1166
    %v1168 = vpop.xlane.xlu0 %1167
    %v1169 = vmul.f32 %v1153, %v239
    %v1170 = vmul.f32 %v1156, %v239
    %v1171 = vmul.f32 %v1159, %v239
    %v1172 = vmul.f32 %v1162, %v239
    %v1173 = vmul.f32 %v1165, %v239
    %v1174 = vmul.f32 %v1168, %v239
    %v1175 = vadd.f32 %v1169, 1e-05
    %v1176 = vadd.f32 %v1170, 1e-05
    %v1177 = vadd.f32 %v1171, 1e-05
    %v1178 = vadd.f32 %v1172, 1e-05
    %v1179 = vadd.f32 %v1173, 1e-05
    %v1180 = vadd.f32 %v1174, 1e-05
    %v1181 = vrsqrt.pop %v1175
    %v1182 = vrsqrt.pop %v1176
    %v1183 = vrsqrt.pop %v1177
    %v1184 = vrsqrt.pop %v1178
    %v1185 = vrsqrt.pop %v1179
    %v1186 = vrsqrt.pop %v1180
    %v1187 = vmul.f32 %v1139, %v1181
    %v1188 = vmul.f32 %v1140, %v1182
    %v1189 = vmul.f32 %v1141, %v1183
    %v1190 = vmul.f32 %v1142, %v1184
    %v1191 = vmul.f32 %v1143, %v1185
    %v1192 = vmul.f32 %v1144, %v1186
    %v1194 = vlaneseq
    %v1195 = vshrl.u32 %v1194, 7
    %v1196 = vsub.s32 0, %v1195
    %v1197 = vrot.slane %v1113, %v1196
    %v1199 = vmul.f32 %v1187, %v1197
    %v1200 = vmul.f32 %v1188, %v1197
    %v1201 = vmul.f32 %v1189, %v1197
    %v1202 = vmul.f32 %v1190, %v1197
    %v1203 = vmul.f32 %v1191, %v1197
    %v1204 = vmul.f32 %v1192, %v1197
    %v1206 = vlaneseq
    %v1207 = vshrl.u32 %v1206, 7
    %v1208 = vsub.s32 0, %v1207
    %v1209 = vrot.slane %v1114, %v1208
    %v1211 = vadd.f32 %v1199, %v1209
    %v1212 = vadd.f32 %v1200, %v1209
    %v1213 = vadd.f32 %v1201, %v1209
    %v1214 = vadd.f32 %v1202, %v1209
    %v1215 = vadd.f32 %v1203, %v1209
    %v1216 = vadd.f32 %v1204, %v1209
    %v1217 = vld [vmem:[%s19] sm:$0xff]
    %v1218 = vld [vmem:[%s19 + $0x8] sm:$0xff]
    %v1219 = vld [vmem:[%s19 + $0x10] sm:$0xff]
    %v1220 = vld [vmem:[%s19 + $0x18] sm:$0xff]
    %v1221 = vld [vmem:[%s20] sm:$0x1]
    %v1223 = vlaneseq
    %v1224 = vshrl.u32 %v1223, 7
    %v1225 = vsub.s32 0, %v1224
    %v1226 = vrot.slane %v1221, %v1225
    %v1229 = vsel %vm196, %v1211, 0
    %v1232 = vsel %vm196, %v1212, 0
    %v1235 = vsel %vm196, %v1213, 0
    %v1238 = vsel %vm196, %v1214, 0
    %v1241 = vsel %vm196, %v1215, 0
    %v1244 = vsel %vm196, %v1216, 0
    %1246 = vmatprep.subr.mxu0 0.0
    %1247 = vmatpush1.msra.mxu0 0.0
    %1248 = vmatprep.subr.mxu0 0.0
    %1249 = vmatpush1.msra.mxu0 0.0
    %1250 = vmatprep.subr.mxu0 0.0
    %1251 = vmatpush1.msra.mxu0 0.0
    %1252 = vmatprep.subr.mxu0 0.0
    %1253 = vmatpush1.msra.mxu0 0.0
    %1254 = vmatprep.subr.mxu0 0.0
    %1255 = vmatpush1.msra.mxu0 0.0
    %1256 = vmatprep.subr.mxu0 0.0
    %1257 = vmatpush1.msra.mxu0 0.0
    %1258 = vmatprep.subr.mxu0 0.0
    %1259 = vmatpush1.msra.mxu0 0.0
    %1260 = vmatprep.subr.mxu0 0.0
    %1261 = vmatpush1.msra.mxu0 0.0
    %1262 = vmatprep.subr.mxu0 0.0
    %1263 = vmatpush1.msra.mxu0 0.0
    %1264 = vmatprep.subr.mxu0 0.0
    %1265 = vmatpush1.msra.mxu0 0.0
    %1266 = vmatprep.subr.mxu0 0.0
    %1267 = vmatpush1.msra.mxu0 0.0
    %1268 = vmatprep.subr.mxu0 0.0
    %1269 = vmatpush1.msra.mxu0 0.0
    %1270 = vmatprep.subr.mxu0 0.0
    %1271 = vmatpush1.msra.mxu0 %v1220
    %1272 = vmatprep.subr.mxu0 0.0
    %1273 = vmatpush1.msra.mxu0 %v1219
    %1274 = vmatprep.subr.mxu0 0.0
    %1275 = vmatpush1.msra.mxu0 %v1218
    %1276 = vmatprep.subr.mxu0 0.0
    %1277 = vmatpush1.msra.mxu0 %v1217
    %1278 = vmatprep.subr.mxu0 0.0
    %1279 = vmatpush2.msra.mxu0 0.0
    %1280 = vmatprep.subr.mxu0 0.0
    %1281 = vmatpush2.msra.mxu0 0.0
    %1282 = vmatprep.subr.mxu0 0.0
    %1283 = vmatpush2.msra.mxu0 0.0
    %1284 = vmatprep.subr.mxu0 0.0
    %1285 = vmatpush2.msra.mxu0 0.0
    %1286 = vmatprep.subr.mxu0 0.0
    %1287 = vmatpush2.msra.mxu0 0.0
    %1288 = vmatprep.subr.mxu0 0.0
    %1289 = vmatpush2.msra.mxu0 0.0
    %1290 = vmatprep.subr.mxu0 0.0
    %1291 = vmatpush2.msra.mxu0 0.0
    %1292 = vmatprep.subr.mxu0 0.0
    %1293 = vmatpush2.msra.mxu0 0.0
    %1294 = vmatprep.subr.mxu0 0.0
    %1295 = vmatpush2.msra.mxu0 0.0
    %1296 = vmatprep.subr.mxu0 0.0
    %1297 = vmatpush2.msra.mxu0 0.0
    %1298 = vmatprep.subr.mxu0 0.0
    %1299 = vmatpush2.msra.mxu0 0.0
    %1300 = vmatprep.subr.mxu0 0.0
    %1301 = vmatpush2.msra.mxu0 0.0
    %1302 = vmatprep.subr.mxu0 0.0
    %1303 = vmatpush2.msra.mxu0 0.0
    %1304 = vmatprep.subr.mxu0 0.0
    %1305 = vmatpush2.msra.mxu0 0.0
    %1306 = vmatprep.subr.mxu0 0.0
    %1307 = vmatpush2.msra.mxu0 0.0
    %1308 = vmatprep.subr.mxu0 0.0
    %1309 = vmatpush2.msra.mxu0 0.0
    %1310 = vmatprep.mubr.f32.mxu0 0.0
    %1311 = vmatmul.mubr.f32.gmra.mxu0 %v1229
    %v1312 = vpop.f32.mrf.mxu0
    %v1313 = vadd.f32 %v1226, %v1312
    %v1314 = vpop.f32.mrf.mxu0
    %1315 = vmatprep.mubr.f32.mxu0 0.0
    %1316 = vmatmul.mubr.f32.gmra.mxu0 %v1232
    %v1317 = vpop.f32.mrf.mxu0
    %v1318 = vadd.f32 %v1226, %v1317
    %v1319 = vpop.f32.mrf.mxu0
    %1320 = vmatprep.mubr.f32.mxu0 0.0
    %1321 = vmatmul.mubr.f32.gmra.mxu0 %v1235
    %v1322 = vpop.f32.mrf.mxu0
    %v1323 = vadd.f32 %v1226, %v1322
    %v1324 = vpop.f32.mrf.mxu0
    %1325 = vmatprep.mubr.f32.mxu0 0.0
    %1326 = vmatmul.mubr.f32.gmra.mxu0 %v1238
    %v1327 = vpop.f32.mrf.mxu0
    %v1328 = vadd.f32 %v1226, %v1327
    %v1329 = vpop.f32.mrf.mxu0
    %1330 = vmatprep.mubr.f32.mxu0 0.0
    %1331 = vmatmul.mubr.f32.gmra.mxu0 %v1241
    %v1332 = vpop.f32.mrf.mxu0
    %v1333 = vadd.f32 %v1226, %v1332
    %v1334 = vpop.f32.mrf.mxu0
    %1335 = vmatprep.mubr.f32.mxu0 0.0
    %1336 = vmatmul.mubr.f32.gmra.mxu0 %v1244
    %v1337 = vpop.f32.mrf.mxu0
    %v1338 = vadd.f32 %v1226, %v1337
    %v1339 = vpop.f32.mrf.mxu0
    %1340 = vdwg.mxu0
    %v1341 = vmul.f32 %v1313, %v1313
    %v1342 = vmul.f32 %v1318, %v1318
    %v1343 = vmul.f32 %v1323, %v1323
    %v1344 = vmul.f32 %v1328, %v1328
    %v1345 = vmul.f32 %v1333, %v1333
    %v1346 = vmul.f32 %v1338, %v1338
    %v1347 = vmul.f32 %v1313, %v1341
    %v1348 = vmul.f32 %v1318, %v1342
    %v1349 = vmul.f32 %v1323, %v1343
    %v1350 = vmul.f32 %v1328, %v1344
    %v1351 = vmul.f32 %v1333, %v1345
    %v1352 = vmul.f32 %v1338, %v1346
    %v1353 = vmul.f32 %v1347, 0.044715
    %v1354 = vmul.f32 %v1348, 0.044715
    %v1355 = vmul.f32 %v1349, 0.044715
    %v1356 = vmul.f32 %v1350, 0.044715
    %v1357 = vmul.f32 %v1351, 0.044715
    %v1358 = vmul.f32 %v1352, 0.044715
    %v1359 = vadd.f32 %v1313, %v1353
    %v1360 = vadd.f32 %v1318, %v1354
    %v1361 = vadd.f32 %v1323, %v1355
    %v1362 = vadd.f32 %v1328, %v1356
    %v1363 = vadd.f32 %v1333, %v1357
    %v1364 = vadd.f32 %v1338, %v1358
    %v1365 = vmul.f32 %v1359, 0.7978846
    %v1366 = vmul.f32 %v1360, 0.7978846
    %v1367 = vmul.f32 %v1361, 0.7978846
    %v1368 = vmul.f32 %v1362, 0.7978846
    %v1369 = vmul.f32 %v1363, 0.7978846
    %v1370 = vmul.f32 %v1364, 0.7978846
    %v1371 = vtanh.pop %v1365
    %v1372 = vtanh.pop %v1366
    %v1373 = vtanh.pop %v1367
    %v1374 = vtanh.pop %v1368
    %v1375 = vtanh.pop %v1369
    %v1376 = vtanh.pop %v1370
    %v1377 = vadd.f32 %v1371, 1.0
    %v1378 = vadd.f32 %v1372, 1.0
    %v1379 = vadd.f32 %v1373, 1.0
    %v1380 = vadd.f32 %v1374, 1.0
    %v1381 = vadd.f32 %v1375, 1.0
    %v1382 = vadd.f32 %v1376, 1.0
    %v1383 = vmul.f32 %v1377, 0.5
    %v1384 = vmul.f32 %v1378, 0.5
    %v1385 = vmul.f32 %v1379, 0.5
    %v1386 = vmul.f32 %v1380, 0.5
    %v1387 = vmul.f32 %v1381, 0.5
    %v1388 = vmul.f32 %v1382, 0.5
    %v1389 = vmul.f32 %v1313, %v1383
    %v1390 = vmul.f32 %v1318, %v1384
    %v1391 = vmul.f32 %v1323, %v1385
    %v1392 = vmul.f32 %v1328, %v1386
    %v1393 = vmul.f32 %v1333, %v1387
    %v1394 = vmul.f32 %v1338, %v1388
    %v1395 = vld [vmem:[%s21] sm:$0xff]
    %v1396 = vld [vmem:[%s21 + $0x8] sm:$0xff]
    %v1397 = vld [vmem:[%s21 + $0x10] sm:$0xff]
    %v1398 = vld [vmem:[%s21 + $0x18] sm:$0xff]
    %v1399 = vld [vmem:[%s21 + $0x20] sm:$0xff]
    %v1400 = vld [vmem:[%s21 + $0x28] sm:$0xff]
    %v1401 = vld [vmem:[%s21 + $0x30] sm:$0xff]
    %v1402 = vld [vmem:[%s21 + $0x38] sm:$0xff]
    %v1403 = vld [vmem:[%s21 + $0x40] sm:$0xff]
    %v1404 = vld [vmem:[%s21 + $0x48] sm:$0xff]
    %v1405 = vld [vmem:[%s21 + $0x50] sm:$0xff]
    %v1406 = vld [vmem:[%s21 + $0x58] sm:$0xff]
    %v1407 = vld [vmem:[%s21 + $0x60] sm:$0xff]
    %v1408 = vld [vmem:[%s21 + $0x68] sm:$0xff]
    %v1409 = vld [vmem:[%s21 + $0x70] sm:$0xff]
    %v1410 = vld [vmem:[%s21 + $0x78] sm:$0xff]
    %v1411 = vld [vmem:[%s22] sm:$0x1]
    %v1413 = vlaneseq
    %v1414 = vshrl.u32 %v1413, 7
    %v1415 = vsub.s32 0, %v1414
    %v1416 = vrot.slane %v1411, %v1415
    %1418 = vmatprep.subr.mxu0 0.0
    %1419 = vmatpush1.msra.mxu0 %v1410
    %1420 = vmatprep.subr.mxu0 0.0
    %1421 = vmatpush1.msra.mxu0 %v1409
    %1422 = vmatprep.subr.mxu0 0.0
    %1423 = vmatpush1.msra.mxu0 %v1408
    %1424 = vmatprep.subr.mxu0 0.0
    %1425 = vmatpush1.msra.mxu0 %v1407
    %1426 = vmatprep.subr.mxu0 0.0
    %1427 = vmatpush1.msra.mxu0 %v1406
    %1428 = vmatprep.subr.mxu0 0.0
    %1429 = vmatpush1.msra.mxu0 %v1405
    %1430 = vmatprep.subr.mxu0 0.0
    %1431 = vmatpush1.msra.mxu0 %v1404
    %1432 = vmatprep.subr.mxu0 0.0
    %1433 = vmatpush1.msra.mxu0 %v1403
    %1434 = vmatprep.subr.mxu0 0.0
    %1435 = vmatpush1.msra.mxu0 %v1402
    %1436 = vmatprep.subr.mxu0 0.0
    %1437 = vmatpush1.msra.mxu0 %v1401
    %1438 = vmatprep.subr.mxu0 0.0
    %1439 = vmatpush1.msra.mxu0 %v1400
    %1440 = vmatprep.subr.mxu0 0.0
    %1441 = vmatpush1.msra.mxu0 %v1399
    %1442 = vmatprep.subr.mxu0 0.0
    %1443 = vmatpush1.msra.mxu0 %v1398
    %1444 = vmatprep.subr.mxu0 0.0
    %1445 = vmatpush1.msra.mxu0 %v1397
    %1446 = vmatprep.subr.mxu0 0.0
    %1447 = vmatpush1.msra.mxu0 %v1396
    %1448 = vmatprep.subr.mxu0 0.0
    %1449 = vmatpush1.msra.mxu0 %v1395
    %1450 = vmatprep.subr.mxu0 0.0
    %1451 = vmatpush2.msra.mxu0 0.0
    %1452 = vmatprep.subr.mxu0 0.0
    %1453 = vmatpush2.msra.mxu0 0.0
    %1454 = vmatprep.subr.mxu0 0.0
    %1455 = vmatpush2.msra.mxu0 0.0
    %1456 = vmatprep.subr.mxu0 0.0
    %1457 = vmatpush2.msra.mxu0 0.0
    %1458 = vmatprep.subr.mxu0 0.0
    %1459 = vmatpush2.msra.mxu0 0.0
    %1460 = vmatprep.subr.mxu0 0.0
    %1461 = vmatpush2.msra.mxu0 0.0
    %1462 = vmatprep.subr.mxu0 0.0
    %1463 = vmatpush2.msra.mxu0 0.0
    %1464 = vmatprep.subr.mxu0 0.0
    %1465 = vmatpush2.msra.mxu0 0.0
    %1466 = vmatprep.subr.mxu0 0.0
    %1467 = vmatpush2.msra.mxu0 0.0
    %1468 = vmatprep.subr.mxu0 0.0
    %1469 = vmatpush2.msra.mxu0 0.0
    %1470 = vmatprep.subr.mxu0 0.0
    %1471 = vmatpush2.msra.mxu0 0.0
    %1472 = vmatprep.subr.mxu0 0.0
    %1473 = vmatpush2.msra.mxu0 0.0
    %1474 = vmatprep.subr.mxu0 0.0
    %1475 = vmatpush2.msra.mxu0 0.0
    %1476 = vmatprep.subr.mxu0 0.0
    %1477 = vmatpush2.msra.mxu0 0.0
    %1478 = vmatprep.subr.mxu0 0.0
    %1479 = vmatpush2.msra.mxu0 0.0
    %1480 = vmatprep.subr.mxu0 0.0
    %1481 = vmatpush2.msra.mxu0 0.0
    %1482 = vmatprep.mubr.f32.mxu0 0.0
    %1483 = vmatmul.mubr.f32.gmra.mxu0 %v1389
    %v1484 = vpop.f32.mrf.mxu0
    %v1485 = vadd.f32 %v1416, %v1484
    %v1486 = vpop.f32.mrf.mxu0
    %1487 = vmatprep.mubr.f32.mxu0 0.0
    %1488 = vmatmul.mubr.f32.gmra.mxu0 %v1390
    %v1489 = vpop.f32.mrf.mxu0
    %v1490 = vadd.f32 %v1416, %v1489
    %v1491 = vpop.f32.mrf.mxu0
    %1492 = vmatprep.mubr.f32.mxu0 0.0
    %1493 = vmatmul.mubr.f32.gmra.mxu0 %v1391
    %v1494 = vpop.f32.mrf.mxu0
    %v1495 = vadd.f32 %v1416, %v1494
    %v1496 = vpop.f32.mrf.mxu0
    %1497 = vmatprep.mubr.f32.mxu0 0.0
    %1498 = vmatmul.mubr.f32.gmra.mxu0 %v1392
    %v1499 = vpop.f32.mrf.mxu0
    %v1500 = vadd.f32 %v1416, %v1499
    %v1501 = vpop.f32.mrf.mxu0
    %1502 = vmatprep.mubr.f32.mxu0 0.0
    %1503 = vmatmul.mubr.f32.gmra.mxu0 %v1393
    %v1504 = vpop.f32.mrf.mxu0
    %v1505 = vadd.f32 %v1416, %v1504
    %v1506 = vpop.f32.mrf.mxu0
    %1507 = vmatprep.mubr.f32.mxu0 0.0
    %1508 = vmatmul.mubr.f32.gmra.mxu0 %v1394
    %v1509 = vpop.f32.mrf.mxu0
    %v1510 = vadd.f32 %v1416, %v1509
    %v1511 = vpop.f32.mrf.mxu0
    %1512 = vdwg.mxu0
    %v1513 = vadd.f32 %v1107, %v1485
    %v1514 = vadd.f32 %v1108, %v1490
    %v1515 = vadd.f32 %v1109, %v1495
    %v1516 = vadd.f32 %v1110, %v1500
    %v1517 = vadd.f32 %v1111, %v1505
    %v1518 = vadd.f32 %v1112, %v1510
    %1519 = vst.msk [vmem:[#allocation3] sm:$0xff] %vm196, %v1513
    %1520 = vst.msk [vmem:[#allocation3 + $0x8] sm:$0xff] %vm196, %v1514
    %1521 = vst.msk [vmem:[#allocation3 + $0x10] sm:$0xff] %vm196, %v1515
    %1522 = vst.msk [vmem:[#allocation3 + $0x18] sm:$0xff] %vm196, %v1516
    %1523 = vst.msk [vmem:[#allocation3 + $0x20] sm:$0xff] %vm196, %v1517
    %1524 = vst.msk [vmem:[#allocation3 + $0x28] sm:$0xff] %vm196, %v1518
    // Predicated region
    $region94: #{turry_forward.1} parent=1 // pred_check
      _
    $region95: #{turry_forward.1} parent=1 // pred_check_branch
      %1526 = sbr.rel (0) target = $region97
    $region96: #{turry_forward.1} parent=1 // pred_region
      %s1528 = ssub.s32 768, 768
      %1529 = vsyncadd [#allocation4], %s1528
      %s1530 = sshll.u32 [#allocation3], 4
      %s1531 = int_to_ptr.vmem [resolvable:$true] %s1530
      %1536 = dma.vmem_to_hbm [thread:$0]  %s1531, 768, %s23, [#allocation4], 128, 128, 8
    $region97: #{turry_forward.1} parent=1 // pred_fallthru
      _
    // Predicated region
    $region98: #{turry_forward.1} parent=1 // pred_check
      _
    $region99: #{turry_forward.1} parent=1 // pred_check_branch
      %1538 = sbr.rel (0) target = $region101
    $region100: #{turry_forward.1} parent=1 // pred_region
      %1539 = dma.done [#allocation4], 768
    $region101: #{turry_forward.1} parent=1 // pred_fallthru
      _
    %1540 = vsyncpa [#allocation4], 1

</llo_original>
